<compile_context>
chip_gen: v7x
topology: tpu7x:2x2x1
jax: 0.10.0
libtpu: 0.0.40
codegen_flags: <defaults>
</compile_context>

<pallas_src>
import functools
import math

import jax
import jax.numpy as jnp
from jax import lax
from jax.experimental import pallas as pl
from jax.experimental.pallas import tpu as pltpu


def _fused_mha_kernel(q_ref, k_ref, v_ref, wq_ref, wk_ref, o_ref, w_ref,
                      kp_ref, vp_ref, *, head_nums, depth):
    """One (batch, q-tile) grid step.

    q_ref : (1, tq, D) bf16          k_ref/v_ref : (1, S, D) bf16
    wq_ref/wk_ref : (D, D) bf16, torch Linear layout (out_features, in_features);
                    wq_ref already carries the 1/sqrt(depth) softmax scale.
    o_ref : (1, tq, D) f32  -- already in the final (B, S, D) layout
    w_ref : (1, H, tq, S)   -- attention weights (bf16 by default)
    kp_ref / vp_ref : (S, D) bf16 VMEM scratch -- projected K / V, cached per batch
    """
    contract_last = (((1,), (1,)), ((), ()))   # x @ W.T / q @ k.T without transposes

    # Project K and V once per batch element. The q-tile axis is the inner,
    # "arbitrary" grid axis, so program_id(1) == 0 exactly when a new batch element
    # starts. v is projected with WK, mirroring the reference module.
    @pl.when(pl.program_id(1) == 0)
    def _():
        kp = lax.dot_general(k_ref[0], wk_ref[...], contract_last,
                             preferred_element_type=jnp.float32)
        vp = lax.dot_general(v_ref[0], wk_ref[...], contract_last,
                             preferred_element_type=jnp.float32)
        kp_ref[...] = kp.astype(jnp.bfloat16)
        vp_ref[...] = vp.astype(jnp.bfloat16)

    # Q projection for this tile (bf16 MXU operands, f32 accumulation).
    qp = lax.dot_general(q_ref[0], wq_ref[...], contract_last,
                         preferred_element_type=jnp.float32)
    qpb = qp.astype(jnp.bfloat16)
    kpb = kp_ref[...]
    vpb = vp_ref[...]

    aligned = (depth % 128 == 0)
    outs = []
    for h in range(head_nums):            # static (unrolled) loop over heads
        lo, hi = h * depth, (h + 1) * depth
        qh = qpb[:, lo:hi]                 # (tq, depth)
        kh = kpb[:, lo:hi]                 # (S,  depth)
        vh = vpb[:, lo:hi]                 # (S,  depth)

        # Scores: contract head dims directly -- no in-kernel transpose of k.
        # (WQ was pre-scaled in the wrapper, so no score scaling here.)
        s = lax.dot_general(qh, kh, contract_last,
                            preferred_element_type=jnp.float32)        # (tq, S)

        # Numerically stable softmax over keys, in f32. Exact reciprocal (on a
        # (tq, 1) vector, essentially free) so returned weight rows sum to 1.
        m = jnp.max(s, axis=-1, keepdims=True)
        e = jnp.exp(s - m)
        denom = jnp.sum(e, axis=-1, keepdims=True)
        attn = e * pl.reciprocal(denom, approx=False)                   # (tq, S) f32

        w_ref[0, h] = attn.astype(w_ref.dtype)                          # bf16 store
        head_out = jnp.dot(attn.astype(jnp.bfloat16), vh,
                           preferred_element_type=jnp.float32)          # (tq, depth)
        if aligned:
            o_ref[0, :, lo:hi] = head_out          # lane-aligned per-head store
        else:
            outs.append(head_out)

    if not aligned:
        # Single lane-dense store; heads contiguous along dim_model is exactly
        # sdpa_output.transpose(1, 2).reshape(B, -1, dim_model).
        o_ref[0] = jnp.concatenate(outs, axis=-1)


def _vmem_capacity_bytes():
    """Physical VMEM per TensorCore, with a conservative fallback."""
    try:
        cap = getattr(pltpu.get_tpu_info(), "vmem_capacity_bytes", None)
        if cap:
            return int(cap)
    except Exception:
        pass
    return 64 * 1024 * 1024   # v7x per-TC size; safe lower bound for v5e/v6e too


def _pick_tq(S, D, H, w_itemsize, vmem_budget, max_tq):
    """Largest q-tile that keeps the double-buffered pipeline inside the VMEM budget."""
    # tq-independent VMEM: double-buffered k/v inputs (bf16), the two resident DxD
    # weights (x2 buffers), and the two (S, D) bf16 projection caches.
    fixed = 2 * 2 * S * D * 2 + 2 * 2 * D * D * 2 + 2 * S * D * 2
    # Per-q-row VMEM: q in (bf16 x2), o out (f32 x2), attention-weights out (x2,
    # dominant term), plus in-kernel f32/bf16 intermediates (qp, scores, exp, ...).
    per_row = (2 * D * 2 + 2 * D * 4 + 2 * H * S * w_itemsize
               + 4 * D * 4 + 6 * S * 4)
    cap = max(8, (vmem_budget - fixed) // per_row)
    cap = min(int(cap), 1024)           # bound per-step latency / store size
    if max_tq is not None:
        cap = min(cap, int(max_tq))
    cap = max(cap, 8)
    if S <= cap:
        return S                        # whole sequence per grid step
    # Prefer a multiple-of-8 divisor of S so there is no ragged tail tile.
    start = cap - cap % 8
    for d in range(start, 7, -8):
        if S % d == 0:
            return d
    return max(8, start)                # ragged tail handled by cdiv grid + masking


def multi_head_attention(q, k, v, WQ, WK, WV, head_nums, mask=None,
                         weights_dtype=jnp.bfloat16, max_tq=None):
    """Mirrors MultiHeadAttention.forward. Returns (output, att_weights).

    att_weights is bf16 by default (halves the dominant HBM writeback traffic);
    pass weights_dtype=jnp.float32 for an exact dtype match with the PyTorch module.
    """
    # TODO(synk): mask path of AttentionUtils.scaled_dot_product_attention not
    # reproduced (source not provided); only mask=None is supported here.
    assert mask is None
    del WV  # created but unused in the reference forward (v is projected with WK)

    B, S, D = q.shape
    assert D % head_nums == 0
    depth = D // head_nums
    scale = 1.0 / math.sqrt(depth)

    cap = _vmem_capacity_bytes()
    vmem_budget = int(cap * 0.70)       # headroom for compiler temporaries / spills
    vmem_limit = int(cap * 0.90)
    w_itemsize = jnp.dtype(weights_dtype).itemsize
    tq = _pick_tq(S, D, head_nums, w_itemsize, vmem_budget, max_tq)
    n_q = pl.cdiv(S, tq)

    # bf16 MXU operands (f32 accumulation in-kernel); also halves input DMA bytes.
    qb = q.astype(jnp.bfloat16)
    kb = k.astype(jnp.bfloat16)
    vb = v.astype(jnp.bfloat16)
    # Fold the 1/sqrt(depth) softmax scale into WQ (one-time wrapper op) so the
    # kernel never multiplies the (tq, S) score matrix by a scalar per head.
    wqb = (WQ * scale).astype(jnp.bfloat16)
    wkb = WK.astype(jnp.bfloat16)

    kernel = functools.partial(_fused_mha_kernel, head_nums=head_nums, depth=depth)

    output, att_weights = pl.pallas_call(
        kernel,
        grid=(B, n_q),
        out_shape=(
            jax.ShapeDtypeStruct((B, S, D), jnp.float32),
            jax.ShapeDtypeStruct((B, head_nums, S, S), weights_dtype),
        ),
        in_specs=[
            pl.BlockSpec((1, tq, D), lambda b, i: (b, i, 0)),      # q tile
            pl.BlockSpec((1, S, D), lambda b, i: (b, 0, 0)),       # k (full keys)
            pl.BlockSpec((1, S, D), lambda b, i: (b, 0, 0)),       # v (full keys)
            pl.BlockSpec((D, D), lambda b, i: (0, 0)),             # WQ (resident)
            pl.BlockSpec((D, D), lambda b, i: (0, 0)),             # WK (resident)
        ],
        out_specs=(
            pl.BlockSpec((1, tq, D), lambda b, i: (b, i, 0)),
            pl.BlockSpec((1, head_nums, tq, S), lambda b, i: (b, 0, i, 0)),
        ),
        scratch_shapes=[
            pltpu.VMEM((S, D), jnp.bfloat16),   # cached projected K
            pltpu.VMEM((S, D), jnp.bfloat16),   # cached projected V
        ],
        compiler_params=pltpu.CompilerParams(
            # The q-tile axis must be "arbitrary": the K/V projection cache is
            # carried across it.  The batch axis stays "parallel" (megacore).
            dimension_semantics=("parallel", "arbitrary"),
            vmem_limit_bytes=vmem_limit,
        ),
    )(qb, kb, vb, wqb, wkb)

    return output, att_weights


# ---------------------------------------------------------------------------
# Pure-JAX f32 reference for a correctness check
# ---------------------------------------------------------------------------
def _reference(q, k, v, WQ, WK, head_nums):
    B, S, D = q.shape
    depth = D // head_nums
    qp = q @ WQ.T
    kp = k @ WK.T
    vp = v @ WK.T

    def split(x):
        return x.reshape(B, S, head_nums, depth).transpose(0, 2, 1, 3)

    qs, ks, vs = split(qp), split(kp), split(vp)
    scores = jnp.einsum("bhqd,bhkd->bhqk", qs, ks) / math.sqrt(depth)
    attn = jax.nn.softmax(scores, axis=-1)
    out = jnp.einsum("bhqk,bhkd->bhqd", attn, vs)
    out = out.transpose(0, 2, 1, 3).reshape(B, S, D)
    return out, attn


if __name__ == "__main__":
    batch_size, seq_len, dim_model, head_nums = 2, 8, 32, 4

    key = jax.random.PRNGKey(0)
    kq, kk, kv, kwq, kwk, kwv = jax.random.split(key, 6)

    q = jax.random.normal(kq, (batch_size, seq_len, dim_model), dtype=jnp.float32)
    k = jax.random.normal(kk, (batch_size, seq_len, dim_model), dtype=jnp.float32)
    v = jax.random.normal(kv, (batch_size, seq_len, dim_model), dtype=jnp.float32)

    # Deterministic synthetic weights, torch Linear layout (out_features, in_features)
    WQ = jax.random.normal(kwq, (dim_model, dim_model), dtype=jnp.float32) * 0.1
    WK = jax.random.normal(kwk, (dim_model, dim_model), dtype=jnp.float32) * 0.1
    WV = jax.random.normal(kwv, (dim_model, dim_model), dtype=jnp.float32) * 0.1

    output, att_weights = multi_head_attention(q, k, v, WQ, WK, WV, head_nums)
    output = jax.block_until_ready(output)
    att_weights = jax.block_until_ready(att_weights)

    ref_out, ref_attn = _reference(q, k, v, WQ, WK, head_nums)
    assert output.shape == (batch_size, seq_len, dim_model)
    assert att_weights.shape == (batch_size, head_nums, seq_len, seq_len)
    # bf16 MXU operands + bf16-stored weights => compare against the f32 reference
    # with a correspondingly looser tolerance.
    assert jnp.allclose(output, ref_out, atol=2e-2, rtol=2e-2)
    assert jnp.allclose(att_weights.astype(jnp.float32), ref_attn,
                        atol=2e-2, rtol=2e-2)

    # Second check: force multiple q-tiles (max_tq=8 on seq_len=32) so the
    # K/V-projection VMEM cache is actually reused across tiles within a batch.
    seq_len2 = 32
    kq2, kk2, kv2 = jax.random.split(jax.random.PRNGKey(1), 3)
    q2 = jax.random.normal(kq2, (batch_size, seq_len2, dim_model), dtype=jnp.float32)
    k2 = jax.random.normal(kk2, (batch_size, seq_len2, dim_model), dtype=jnp.float32)
    v2 = jax.random.normal(kv2, (batch_size, seq_len2, dim_model), dtype=jnp.float32)

    out2, w2 = multi_head_attention(q2, k2, v2, WQ, WK, WV, head_nums, max_tq=8)
    out2 = jax.block_until_ready(out2)
    w2 = jax.block_until_ready(w2)
    ref_out2, ref_attn2 = _reference(q2, k2, v2, WQ, WK, head_nums)
    assert out2.shape == (batch_size, seq_len2, dim_model)
    assert w2.shape == (batch_size, head_nums, seq_len2, seq_len2)
    assert jnp.allclose(out2, ref_out2, atol=2e-2, rtol=2e-2)
    assert jnp.allclose(w2.astype(jnp.float32), ref_attn2, atol=2e-2, rtol=2e-2)

    print("KERNEL_OK")
</pallas_src>

<mosaic_0001>
module attributes {stable_mosaic.version = 11 : i64} {
  func.func @_fused_mha_kernel(%arg0: i32, %arg1: i32, %arg2: memref<1x8x32xbf16, #tpu.memory_space<vmem>>, %arg3: memref<1x8x32xbf16, #tpu.memory_space<vmem>>, %arg4: memref<1x8x32xbf16, #tpu.memory_space<vmem>>, %arg5: memref<32x32xbf16, #tpu.memory_space<vmem>>, %arg6: memref<32x32xbf16, #tpu.memory_space<vmem>>, %arg7: memref<1x8x32xf32, #tpu.memory_space<vmem>>, %arg8: memref<1x4x8x8xbf16, #tpu.memory_space<vmem>>, %arg9: memref<8x32xbf16, #tpu.memory_space<vmem>>, %arg10: memref<8x32xbf16, #tpu.memory_space<vmem>>) attributes {dimension_semantics = [#tpu.dimension_semantics<parallel>, #tpu.dimension_semantics<arbitrary>], iteration_bounds = array<i64: 2, 1>, scalar_prefetch = 0 : i64, scratch_operands = 2 : i64, tpu.core_type = #tpu.core_type<tc>, window_params = [{transform_indices = @transform_0, window_bounds = array<i64: 1, 8, 32>}, {transform_indices = @transform_1, window_bounds = array<i64: 1, 8, 32>}, {transform_indices = @transform_2, window_bounds = array<i64: 1, 8, 32>}, {pipeline_mode = #tpu.pipeline_mode<synchronous>, transform_indices = @transform_3, window_bounds = array<i64: 32, 32>}, {pipeline_mode = #tpu.pipeline_mode<synchronous>, transform_indices = @transform_4, window_bounds = array<i64: 32, 32>}, {transform_indices = @transform_5, window_bounds = array<i64: 1, 8, 32>}, {transform_indices = @transform_6, window_bounds = array<i64: 1, 4, 8, 8>}]} {
    %c0_i32 = arith.constant 0 : i32
    %0 = arith.cmpi eq, %arg1, %c0_i32 : i32
    %1 = arith.extui %0 : i1 to i32
    %c0_i32_0 = arith.constant 0 : i32
    %2 = arith.cmpi ne, %1, %c0_i32_0 : i32
    scf.if %2 {
      %c0_41 = arith.constant 0 : index
      %c0_42 = arith.constant 0 : index
      %c0_43 = arith.constant 0 : index
      %94 = vector.load %arg3[%c0_41, %c0_42, %c0_43] : memref<1x8x32xbf16, #tpu.memory_space<vmem>>, vector<1x8x32xbf16>
      %95 = vector.shape_cast %94 : vector<1x8x32xbf16> to vector<8x32xbf16>
      %c0_44 = arith.constant 0 : index
      %c0_45 = arith.constant 0 : index
      %96 = vector.load %arg6[%c0_44, %c0_45] : memref<32x32xbf16, #tpu.memory_space<vmem>>, vector<32x32xbf16>
      %cst_46 = arith.constant dense<0.000000e+00> : vector<8x32xf32>
      %97 = tpu.matmul %95, %96, %cst_46 {dimension_numbers = #tpu.dot_dimension_numbers<[1], [1], [0], [0], [0, 0, 1, 0], [], []>} : vector<8x32xbf16>, vector<32x32xbf16>, vector<8x32xf32> -> vector<8x32xf32>
      %c0_47 = arith.constant 0 : index
      %c0_48 = arith.constant 0 : index
      %c0_49 = arith.constant 0 : index
      %98 = vector.load %arg4[%c0_47, %c0_48, %c0_49] : memref<1x8x32xbf16, #tpu.memory_space<vmem>>, vector<1x8x32xbf16>
      %99 = vector.shape_cast %98 : vector<1x8x32xbf16> to vector<8x32xbf16>
      %c0_50 = arith.constant 0 : index
      %c0_51 = arith.constant 0 : index
      %100 = vector.load %arg6[%c0_50, %c0_51] : memref<32x32xbf16, #tpu.memory_space<vmem>>, vector<32x32xbf16>
      %cst_52 = arith.constant dense<0.000000e+00> : vector<8x32xf32>
      %101 = tpu.matmul %99, %100, %cst_52 {dimension_numbers = #tpu.dot_dimension_numbers<[1], [1], [0], [0], [0, 0, 1, 0], [], []>} : vector<8x32xbf16>, vector<32x32xbf16>, vector<8x32xf32> -> vector<8x32xf32>
      %102 = arith.truncf %97 : vector<8x32xf32> to vector<8x32xbf16>
      %c0_53 = arith.constant 0 : index
      %c0_54 = arith.constant 0 : index
      %103 = vector.load %arg9[%c0_53, %c0_54] : memref<8x32xbf16, #tpu.memory_space<vmem>>, vector<8x32xbf16>
      tpu.vector_store %arg9[%c0_53, %c0_54], %102 {strides = array<i32>} : memref<8x32xbf16, #tpu.memory_space<vmem>>, vector<8x32xbf16>,
      %104 = arith.truncf %101 : vector<8x32xf32> to vector<8x32xbf16>
      %c0_55 = arith.constant 0 : index
      %c0_56 = arith.constant 0 : index
      %105 = vector.load %arg10[%c0_55, %c0_56] : memref<8x32xbf16, #tpu.memory_space<vmem>>, vector<8x32xbf16>
      tpu.vector_store %arg10[%c0_55, %c0_56], %104 {strides = array<i32>} : memref<8x32xbf16, #tpu.memory_space<vmem>>, vector<8x32xbf16>,
    } else {
    }
    %c0 = arith.constant 0 : index
    %c0_1 = arith.constant 0 : index
    %c0_2 = arith.constant 0 : index
    %3 = vector.load %arg2[%c0, %c0_1, %c0_2] : memref<1x8x32xbf16, #tpu.memory_space<vmem>>, vector<1x8x32xbf16>
    %4 = vector.shape_cast %3 : vector<1x8x32xbf16> to vector<8x32xbf16>
    %c0_3 = arith.constant 0 : index
    %c0_4 = arith.constant 0 : index
    %5 = vector.load %arg5[%c0_3, %c0_4] : memref<32x32xbf16, #tpu.memory_space<vmem>>, vector<32x32xbf16>
    %cst = arith.constant dense<0.000000e+00> : vector<8x32xf32>
    %6 = tpu.matmul %4, %5, %cst {dimension_numbers = #tpu.dot_dimension_numbers<[1], [1], [0], [0], [0, 0, 1, 0], [], []>} : vector<8x32xbf16>, vector<32x32xbf16>, vector<8x32xf32> -> vector<8x32xf32>
    %7 = arith.truncf %6 : vector<8x32xf32> to vector<8x32xbf16>
    %c0_5 = arith.constant 0 : index
    %c0_6 = arith.constant 0 : index
    %8 = vector.load %arg9[%c0_5, %c0_6] : memref<8x32xbf16, #tpu.memory_space<vmem>>, vector<8x32xbf16>
    %c0_7 = arith.constant 0 : index
    %c0_8 = arith.constant 0 : index
    %9 = vector.load %arg10[%c0_7, %c0_8] : memref<8x32xbf16, #tpu.memory_space<vmem>>, vector<8x32xbf16>
    %10 = vector.extract_strided_slice %7 {offsets = [0, 0], sizes = [8, 8], strides = [1, 1]} : vector<8x32xbf16> to vector<8x8xbf16>
    %11 = vector.extract_strided_slice %8 {offsets = [0, 0], sizes = [8, 8], strides = [1, 1]} : vector<8x32xbf16> to vector<8x8xbf16>
    %12 = vector.extract_strided_slice %9 {offsets = [0, 0], sizes = [8, 8], strides = [1, 1]} : vector<8x32xbf16> to vector<8x8xbf16>
    %cst_9 = arith.constant dense<0.000000e+00> : vector<8x8xf32>
    %13 = tpu.matmul %10, %11, %cst_9 {dimension_numbers = #tpu.dot_dimension_numbers<[1], [1], [0], [0], [0, 0, 1, 0], [], []>} : vector<8x8xbf16>, vector<8x8xbf16>, vector<8x8xf32> -> vector<8x8xf32>
    %cst_10 = arith.constant dense<0xFF800000> : vector<8xf32>
    %14 = vector.multi_reduction <maximumf>, %13, %cst_10 [1] : vector<8x8xf32> to vector<8xf32>
    %15 = vector.shape_cast %14 : vector<8xf32> to vector<8x1xf32>
    %16 = vector.broadcast %15 : vector<8x1xf32> to vector<8x8xf32>
    %17 = arith.subf %13, %16 : vector<8x8xf32>
    %18 = math.exp %17 : vector<8x8xf32>
    %cst_11 = arith.constant dense<0.000000e+00> : vector<8xf32>
    %19 = vector.multi_reduction <add>, %18, %cst_11 [1] : vector<8x8xf32> to vector<8xf32>
    %20 = vector.shape_cast %19 : vector<8xf32> to vector<8x1xf32>
    %21 = tpu.reciprocal %20 : vector<8x1xf32> -> vector<8x1xf32>
    %22 = vector.broadcast %21 : vector<8x1xf32> to vector<8x8xf32>
    %23 = arith.mulf %18, %22 : vector<8x8xf32>
    %24 = arith.truncf %23 : vector<8x8xf32> to vector<8x8xbf16>
    %c0_12 = arith.constant 0 : index
    %c0_13 = arith.constant 0 : index
    %c0_14 = arith.constant 0 : index
    %c0_15 = arith.constant 0 : index
    %25 = vector.load %arg8[%c0_12, %c0_13, %c0_14, %c0_15] : memref<1x4x8x8xbf16, #tpu.memory_space<vmem>>, vector<1x1x8x8xbf16>
    %26 = vector.shape_cast %25 : vector<1x1x8x8xbf16> to vector<8x8xbf16>
    %27 = vector.shape_cast %24 : vector<8x8xbf16> to vector<1x1x8x8xbf16>
    tpu.vector_store %arg8[%c0_12, %c0_13, %c0_14, %c0_15], %27 {strides = array<i32>} : memref<1x4x8x8xbf16, #tpu.memory_space<vmem>>, vector<1x1x8x8xbf16>,
    %28 = arith.truncf %23 : vector<8x8xf32> to vector<8x8xbf16>
    %cst_16 = arith.constant dense<0.000000e+00> : vector<8x8xf32>
    %29 = tpu.matmul %28, %12, %cst_16 {dimension_numbers = #tpu.dot_dimension_numbers<[1], [0], [0], [1], [0, 0, 1, 1], [], []>} : vector<8x8xbf16>, vector<8x8xbf16>, vector<8x8xf32> -> vector<8x8xf32>
    %30 = vector.extract_strided_slice %7 {offsets = [0, 8], sizes = [8, 8], strides = [1, 1]} : vector<8x32xbf16> to vector<8x8xbf16>
    %31 = vector.extract_strided_slice %8 {offsets = [0, 8], sizes = [8, 8], strides = [1, 1]} : vector<8x32xbf16> to vector<8x8xbf16>
    %32 = vector.extract_strided_slice %9 {offsets = [0, 8], sizes = [8, 8], strides = [1, 1]} : vector<8x32xbf16> to vector<8x8xbf16>
    %cst_17 = arith.constant dense<0.000000e+00> : vector<8x8xf32>
    %33 = tpu.matmul %30, %31, %cst_17 {dimension_numbers = #tpu.dot_dimension_numbers<[1], [1], [0], [0], [0, 0, 1, 0], [], []>} : vector<8x8xbf16>, vector<8x8xbf16>, vector<8x8xf32> -> vector<8x8xf32>
    %cst_18 = arith.constant dense<0xFF800000> : vector<8xf32>
    %34 = vector.multi_reduction <maximumf>, %33, %cst_18 [1] : vector<8x8xf32> to vector<8xf32>
    %35 = vector.shape_cast %34 : vector<8xf32> to vector<8x1xf32>
    %36 = vector.broadcast %35 : vector<8x1xf32> to vector<8x8xf32>
    %37 = arith.subf %33, %36 : vector<8x8xf32>
    %38 = math.exp %37 : vector<8x8xf32>
    %cst_19 = arith.constant dense<0.000000e+00> : vector<8xf32>
    %39 = vector.multi_reduction <add>, %38, %cst_19 [1] : vector<8x8xf32> to vector<8xf32>
    %40 = vector.shape_cast %39 : vector<8xf32> to vector<8x1xf32>
    %41 = tpu.reciprocal %40 : vector<8x1xf32> -> vector<8x1xf32>
    %42 = vector.broadcast %41 : vector<8x1xf32> to vector<8x8xf32>
    %43 = arith.mulf %38, %42 : vector<8x8xf32>
    %44 = arith.truncf %43 : vector<8x8xf32> to vector<8x8xbf16>
    %c0_20 = arith.constant 0 : index
    %c1 = arith.constant 1 : index
    %c0_21 = arith.constant 0 : index
    %c0_22 = arith.constant 0 : index
    %45 = vector.load %arg8[%c0_20, %c1, %c0_21, %c0_22] : memref<1x4x8x8xbf16, #tpu.memory_space<vmem>>, vector<1x1x8x8xbf16>
    %46 = vector.shape_cast %45 : vector<1x1x8x8xbf16> to vector<8x8xbf16>
    %47 = vector.shape_cast %44 : vector<8x8xbf16> to vector<1x1x8x8xbf16>
    tpu.vector_store %arg8[%c0_20, %c1, %c0_21, %c0_22], %47 {strides = array<i32>} : memref<1x4x8x8xbf16, #tpu.memory_space<vmem>>, vector<1x1x8x8xbf16>,
    %48 = arith.truncf %43 : vector<8x8xf32> to vector<8x8xbf16>
    %cst_23 = arith.constant dense<0.000000e+00> : vector<8x8xf32>
    %49 = tpu.matmul %48, %32, %cst_23 {dimension_numbers = #tpu.dot_dimension_numbers<[1], [0], [0], [1], [0, 0, 1, 1], [], []>} : vector<8x8xbf16>, vector<8x8xbf16>, vector<8x8xf32> -> vector<8x8xf32>
    %50 = vector.extract_strided_slice %7 {offsets = [0, 16], sizes = [8, 8], strides = [1, 1]} : vector<8x32xbf16> to vector<8x8xbf16>
    %51 = vector.extract_strided_slice %8 {offsets = [0, 16], sizes = [8, 8], strides = [1, 1]} : vector<8x32xbf16> to vector<8x8xbf16>
    %52 = vector.extract_strided_slice %9 {offsets = [0, 16], sizes = [8, 8], strides = [1, 1]} : vector<8x32xbf16> to vector<8x8xbf16>
    %cst_24 = arith.constant dense<0.000000e+00> : vector<8x8xf32>
    %53 = tpu.matmul %50, %51, %cst_24 {dimension_numbers = #tpu.dot_dimension_numbers<[1], [1], [0], [0], [0, 0, 1, 0], [], []>} : vector<8x8xbf16>, vector<8x8xbf16>, vector<8x8xf32> -> vector<8x8xf32>
    %cst_25 = arith.constant dense<0xFF800000> : vector<8xf32>
    %54 = vector.multi_reduction <maximumf>, %53, %cst_25 [1] : vector<8x8xf32> to vector<8xf32>
    %55 = vector.shape_cast %54 : vector<8xf32> to vector<8x1xf32>
    %56 = vector.broadcast %55 : vector<8x1xf32> to vector<8x8xf32>
    %57 = arith.subf %53, %56 : vector<8x8xf32>
    %58 = math.exp %57 : vector<8x8xf32>
    %cst_26 = arith.constant dense<0.000000e+00> : vector<8xf32>
    %59 = vector.multi_reduction <add>, %58, %cst_26 [1] : vector<8x8xf32> to vector<8xf32>
    %60 = vector.shape_cast %59 : vector<8xf32> to vector<8x1xf32>
    %61 = tpu.reciprocal %60 : vector<8x1xf32> -> vector<8x1xf32>
    %62 = vector.broadcast %61 : vector<8x1xf32> to vector<8x8xf32>
    %63 = arith.mulf %58, %62 : vector<8x8xf32>
    %64 = arith.truncf %63 : vector<8x8xf32> to vector<8x8xbf16>
    %c0_27 = arith.constant 0 : index
    %c2 = arith.constant 2 : index
    %c0_28 = arith.constant 0 : index
    %c0_29 = arith.constant 0 : index
    %65 = vector.load %arg8[%c0_27, %c2, %c0_28, %c0_29] : memref<1x4x8x8xbf16, #tpu.memory_space<vmem>>, vector<1x1x8x8xbf16>
    %66 = vector.shape_cast %65 : vector<1x1x8x8xbf16> to vector<8x8xbf16>
    %67 = vector.shape_cast %64 : vector<8x8xbf16> to vector<1x1x8x8xbf16>
    tpu.vector_store %arg8[%c0_27, %c2, %c0_28, %c0_29], %67 {strides = array<i32>} : memref<1x4x8x8xbf16, #tpu.memory_space<vmem>>, vector<1x1x8x8xbf16>,
    %68 = arith.truncf %63 : vector<8x8xf32> to vector<8x8xbf16>
    %cst_30 = arith.constant dense<0.000000e+00> : vector<8x8xf32>
    %69 = tpu.matmul %68, %52, %cst_30 {dimension_numbers = #tpu.dot_dimension_numbers<[1], [0], [0], [1], [0, 0, 1, 1], [], []>} : vector<8x8xbf16>, vector<8x8xbf16>, vector<8x8xf32> -> vector<8x8xf32>
    %70 = vector.extract_strided_slice %7 {offsets = [0, 24], sizes = [8, 8], strides = [1, 1]} : vector<8x32xbf16> to vector<8x8xbf16>
    %71 = vector.extract_strided_slice %8 {offsets = [0, 24], sizes = [8, 8], strides = [1, 1]} : vector<8x32xbf16> to vector<8x8xbf16>
    %72 = vector.extract_strided_slice %9 {offsets = [0, 24], sizes = [8, 8], strides = [1, 1]} : vector<8x32xbf16> to vector<8x8xbf16>
    %cst_31 = arith.constant dense<0.000000e+00> : vector<8x8xf32>
    %73 = tpu.matmul %70, %71, %cst_31 {dimension_numbers = #tpu.dot_dimension_numbers<[1], [1], [0], [0], [0, 0, 1, 0], [], []>} : vector<8x8xbf16>, vector<8x8xbf16>, vector<8x8xf32> -> vector<8x8xf32>
    %cst_32 = arith.constant dense<0xFF800000> : vector<8xf32>
    %74 = vector.multi_reduction <maximumf>, %73, %cst_32 [1] : vector<8x8xf32> to vector<8xf32>
    %75 = vector.shape_cast %74 : vector<8xf32> to vector<8x1xf32>
    %76 = vector.broadcast %75 : vector<8x1xf32> to vector<8x8xf32>
    %77 = arith.subf %73, %76 : vector<8x8xf32>
    %78 = math.exp %77 : vector<8x8xf32>
    %cst_33 = arith.constant dense<0.000000e+00> : vector<8xf32>
    %79 = vector.multi_reduction <add>, %78, %cst_33 [1] : vector<8x8xf32> to vector<8xf32>
    %80 = vector.shape_cast %79 : vector<8xf32> to vector<8x1xf32>
    %81 = tpu.reciprocal %80 : vector<8x1xf32> -> vector<8x1xf32>
    %82 = vector.broadcast %81 : vector<8x1xf32> to vector<8x8xf32>
    %83 = arith.mulf %78, %82 : vector<8x8xf32>
    %84 = arith.truncf %83 : vector<8x8xf32> to vector<8x8xbf16>
    %c0_34 = arith.constant 0 : index
    %c3 = arith.constant 3 : index
    %c0_35 = arith.constant 0 : index
    %c0_36 = arith.constant 0 : index
    %85 = vector.load %arg8[%c0_34, %c3, %c0_35, %c0_36] : memref<1x4x8x8xbf16, #tpu.memory_space<vmem>>, vector<1x1x8x8xbf16>
    %86 = vector.shape_cast %85 : vector<1x1x8x8xbf16> to vector<8x8xbf16>
    %87 = vector.shape_cast %84 : vector<8x8xbf16> to vector<1x1x8x8xbf16>
    tpu.vector_store %arg8[%c0_34, %c3, %c0_35, %c0_36], %87 {strides = array<i32>} : memref<1x4x8x8xbf16, #tpu.memory_space<vmem>>, vector<1x1x8x8xbf16>,
    %88 = arith.truncf %83 : vector<8x8xf32> to vector<8x8xbf16>
    %cst_37 = arith.constant dense<0.000000e+00> : vector<8x8xf32>
    %89 = tpu.matmul %88, %72, %cst_37 {dimension_numbers = #tpu.dot_dimension_numbers<[1], [0], [0], [1], [0, 0, 1, 1], [], []>} : vector<8x8xbf16>, vector<8x8xbf16>, vector<8x8xf32> -> vector<8x8xf32>
    %90 = tpu.concatenate %29, %49, %69, %89 in 1 : vector<8x8xf32>, vector<8x8xf32>, vector<8x8xf32>, vector<8x8xf32> -> vector<8x32xf32>
    %c0_38 = arith.constant 0 : index
    %c0_39 = arith.constant 0 : index
    %c0_40 = arith.constant 0 : index
    %91 = vector.load %arg7[%c0_38, %c0_39, %c0_40] : memref<1x8x32xf32, #tpu.memory_space<vmem>>, vector<1x8x32xf32>
    %92 = vector.shape_cast %91 : vector<1x8x32xf32> to vector<8x32xf32>
    %93 = vector.shape_cast %90 : vector<8x32xf32> to vector<1x8x32xf32>
    tpu.vector_store %arg7[%c0_38, %c0_39, %c0_40], %93 {strides = array<i32>} : memref<1x8x32xf32, #tpu.memory_space<vmem>>, vector<1x8x32xf32>,
    return
  }
  func.func @transform_0(%arg0: i32, %arg1: i32) -> (i32, i32, i32) {
    %c0_i32 = arith.constant 0 : i32
    %c0_i32_0 = arith.constant 0 : i32
    return %arg0, %arg1, %c0_i32 : i32, i32, i32
  }
  func.func @transform_1(%arg0: i32, %arg1: i32) -> (i32, i32, i32) {
    %c0_i32 = arith.constant 0 : i32
    %c0_i32_0 = arith.constant 0 : i32
    %c0_i32_1 = arith.constant 0 : i32
    return %arg0, %c0_i32, %c0_i32_0 : i32, i32, i32
  }
  func.func @transform_2(%arg0: i32, %arg1: i32) -> (i32, i32, i32) {
    %c0_i32 = arith.constant 0 : i32
    %c0_i32_0 = arith.constant 0 : i32
    %c0_i32_1 = arith.constant 0 : i32
    return %arg0, %c0_i32, %c0_i32_0 : i32, i32, i32
  }
  func.func @transform_3(%arg0: i32, %arg1: i32) -> (i32, i32) {
    %c0_i32 = arith.constant 0 : i32
    %c0_i32_0 = arith.constant 0 : i32
    %c0_i32_1 = arith.constant 0 : i32
    return %c0_i32, %c0_i32_0 : i32, i32
  }
  func.func @transform_4(%arg0: i32, %arg1: i32) -> (i32, i32) {
    %c0_i32 = arith.constant 0 : i32
    %c0_i32_0 = arith.constant 0 : i32
    %c0_i32_1 = arith.constant 0 : i32
    return %c0_i32, %c0_i32_0 : i32, i32
  }
  func.func @transform_5(%arg0: i32, %arg1: i32) -> (i32, i32, i32) {
    %c0_i32 = arith.constant 0 : i32
    %c0_i32_0 = arith.constant 0 : i32
    return %arg0, %arg1, %c0_i32 : i32, i32, i32
  }
  func.func @transform_6(%arg0: i32, %arg1: i32) -> (i32, i32, i32, i32) {
    %c0_i32 = arith.constant 0 : i32
    %c0_i32_0 = arith.constant 0 : i32
    %c0_i32_1 = arith.constant 0 : i32
    return %arg0, %c0_i32, %arg1, %c0_i32_0 : i32, i32, i32, i32
  }
}

</mosaic_0001>

<llo_original>
// kernel: tpu_custom_call.1
$region0: #{tpu_custom_call.1}
  #allocation0 [shape = 'u32[]', space=smem, size = 0x4, offset = 0x4, fixed_abs, tag = 'smem constant byte address 0x4 - core index']
  #allocation1 [shape = 'u32[144,128]{1,0:T(1,128)}', space=vmem, size = 0x12000, scoped, tag = 'internal scratch']
  #allocation2 [shape = 'bf16[8,32]{1,0:T(8,128)(2,1)}', space=vmem, size = 0x800, scoped, tag = 'scratch operand']
  #allocation3 [shape = 'bf16[8,32]{1,0:T(8,128)(2,1)}', space=vmem, size = 0x800, scoped, tag = 'scratch operand']
  %s0 = inlined_call_operand.hbm [shape: bf16[2,8,32], index: 0, kind: input, shape index: {}]
  %s1 = inlined_call_operand.hbm [shape: bf16[2,8,32], index: 1, kind: input, shape index: {}]
  %s2 = inlined_call_operand.hbm [shape: bf16[2,8,32], index: 2, kind: input, shape index: {}]
  %s3 = inlined_call_operand.hbm [shape: bf16[32,32], index: 3, kind: input, shape index: {}]
  %s4 = inlined_call_operand.hbm [shape: bf16[32,32], index: 4, kind: input, shape index: {}]
  %s5 = inlined_call_operand.hbm [shape: f32[2,8,32], index: 5, kind: output, shape index: {0}]
  %s6 = inlined_call_operand.hbm [shape: bf16[2,4,8,8], index: 6, kind: output, shape index: {1}]
  %7 = xla_tuple %s5, %s6
  %s8 = sld [smem:[#allocation0]]
  $region85: #{tpu_custom_call.1} parent=0
    _
  %s10 = ssub.s32 1, %s8
  %s11 = scalar_select 0, %s10, %s8
  $region1: #{tpu_custom_call.1} parent=0
    #allocation4 [shape = 'u8[4096]{0}', space=vmem, size = 0x1000, scoped, tag = 'input window, operand 0']
    #allocation5 [shape = 's32[2]{0}', space=sflag, size = 0x8, scoped, tag = 'scoped memory for tpu_custom_call.1']
    #allocation6 [shape = 's32[2]{0}', space=sflag, size = 0x8, scoped, tag = 'scoped memory for tpu_custom_call.1']
    #allocation7 [shape = 'u8[4096]{0}', space=vmem, size = 0x1000, scoped, tag = 'input window, operand 1']
    #allocation8 [shape = 's32[2]{0}', space=sflag, size = 0x8, scoped, tag = 'scoped memory for tpu_custom_call.1']
    #allocation9 [shape = 'u8[4096]{0}', space=vmem, size = 0x1000, scoped, tag = 'input window, operand 2']
    #allocation10 [shape = 'u8[8192]{0}', space=vmem, size = 0x2000, scoped, tag = 'input window, operand 3, single buffered']
    #allocation11 [shape = 's32[1]{0}', space=sflag, size = 0x4, scoped, tag = 'scoped memory for tpu_custom_call.1']
    #allocation12 [shape = 'u8[8192]{0}', space=vmem, size = 0x2000, scoped, tag = 'input window, operand 4, single buffered']
    #allocation13 [shape = 'u8[8192]{0}', space=vmem, size = 0x2000, scoped, tag = 'output window, operand 0']
    #allocation14 [shape = 'u8[16384]{0}', space=vmem, size = 0x4000, scoped, tag = 'output window, operand 1']
    #allocation15 [shape = 's32[2]{0}', space=sflag, size = 0x8, scoped, tag = 'scoped memory for tpu_custom_call.1']
    %12 = vsyncpa [#allocation5], 0
    %s13 = scalar_lea.sflag [#allocation5], 1
    %14 = vsyncpa %s13, 0
    %15 = vsyncpa [#allocation8], 0
    %s16 = scalar_lea.sflag [#allocation8], 1
    %17 = vsyncpa %s16, 0
    %18 = vsyncpa [#allocation11], 0
    %19 = vsyncpa [#allocation6], 0
    %s20 = scalar_lea.sflag [#allocation6], 1
    %21 = vsyncpa %s20, 0
    %22 = vsyncpa [#allocation15], 0
    %s23 = scalar_lea.sflag [#allocation15], 1
    %24 = vsyncpa %s23, 0
    loop: start=0, step=1, limit=4
    $region2: #{tpu_custom_call.1} parent=1 // loop_pre_header
      _
    $region3: #{tpu_custom_call.1} parent=1 // loop_header
      %s26 = sphi 0, %s30
      %p27 = scmp.ge.s32.totalorder %s26, 4
      %s33 = sphi 0, %s45
      %s34 = sphi 0, %s41
      %s35 = sphi 0, %s33
      %s36 = sphi 0, %s34
      %s37 = sphi 0, %s35
      %s38 = sphi 0, %s36
      %s50 = sphi 0, %s52
      %s53 = sphi 0, %s50
      %s54 = sphi 0, %s53
      %s70 = sphi 0, %s54
      %s76 = sphi 0, %s78
      %s79 = sphi 0, %s76
      %s80 = sphi 0, %s79
      %s96 = sphi 0, %s80
      %s102 = sphi 0, %s104
      %s105 = sphi 0, %s102
      %s106 = sphi 0, %s105
      %s122 = sphi 0, %s106
      %s126 = sphi 0, %s126
      %s128 = sphi 0, %s126
      %s129 = sphi 0, %s128
      %s143 = sphi 0, %s129
      %s147 = sphi 0, %s147
      %s149 = sphi 0, %s147
      %s150 = sphi 0, %s149
      %s164 = sphi 0, %s150
      %s172 = sphi 0, %s174
      %s175 = sphi 0, %s172
      %s176 = sphi 0, %s175
      %s192 = sphi 0, %s176
      %s200 = sphi 0, %s202
      %s203 = sphi 0, %s200
      %s204 = sphi 0, %s203
      %s220 = sphi 0, %s204
    $region4: #{tpu_custom_call.1} parent=1 // loop_header_branch
      %29 = sbr.rel (%p27) target = $region8
    $region5: #{tpu_custom_call.1} parent=1 // loop_body
      %s31 = ssub.s32 %s26, 1
      %s32 = ssub.s32 %s26, 2
      %s39 = sadd.s32 1, %s34
      %p40 = scmp.ge.s32.totalorder %s39, 1
      %s41 = scalar_select %p40, 0, %s39
      %s42 = sadd.s32 1, %s33
      %s43 = scalar_select %p40, %s42, %s33
      %p44 = scmp.ge.s32.totalorder %s43, 2
      %s45 = scalar_select %p44, 0, %s43
      %s46 = ssub.s32 %s33, %s45
      %s47 = ssub.s32 %s34, %s41
      %s48 = sor.u32 %s46, %s47
      %p49 = scmp.eq.s32.totalorder %s48, 0
      %s51 = sadd.s32 %s50, 1
      %s52 = scalar_select %p49, %s50, %s51
      %p55 = pneg %p49
      %p56 = scmp.eq.s32.totalorder %s26, 1
      %p57 = por %p55, %p56
      %p58 = scmp.ne.s32.totalorder %s50, %s53
      %p59 = scmp.eq.s32.totalorder %s26, 0
      %p60 = por %p58, %p59
      %p61 = scmp.ne.s32.totalorder %s50, %s53
      %p62 = scmp.eq.s32.totalorder %s31, 1
      %p63 = por %p61, %p62
      %p64 = scmp.ne.s32.totalorder %s53, %s54
      %p65 = scmp.eq.s32.totalorder %s31, 0
      %p66 = por %p64, %p65
      %p67 = scmp.ne.s32.totalorder %s53, %s54
      %p68 = scmp.eq.s32.totalorder %s32, 1
      %p69 = por %p67, %p68
      %p71 = scmp.ne.s32.totalorder %s54, %s70
      %p72 = scmp.eq.s32.totalorder %s32, 0
      %p73 = por %p71, %p72
      %s74 = ssub.s32 %s33, %s45
      %p75 = scmp.eq.s32.totalorder %s74, 0
      %s77 = sadd.s32 %s76, 1
      %s78 = scalar_select %p75, %s76, %s77
      %p81 = pneg %p75
      %p82 = scmp.eq.s32.totalorder %s26, 1
      %p83 = por %p81, %p82
      %p84 = scmp.ne.s32.totalorder %s76, %s79
      %p85 = scmp.eq.s32.totalorder %s26, 0
      %p86 = por %p84, %p85
      %p87 = scmp.ne.s32.totalorder %s76, %s79
      %p88 = scmp.eq.s32.totalorder %s31, 1
      %p89 = por %p87, %p88
      %p90 = scmp.ne.s32.totalorder %s79, %s80
      %p91 = scmp.eq.s32.totalorder %s31, 0
      %p92 = por %p90, %p91
      %p93 = scmp.ne.s32.totalorder %s79, %s80
      %p94 = scmp.eq.s32.totalorder %s32, 1
      %p95 = por %p93, %p94
      %p97 = scmp.ne.s32.totalorder %s80, %s96
      %p98 = scmp.eq.s32.totalorder %s32, 0
      %p99 = por %p97, %p98
      %s100 = ssub.s32 %s33, %s45
      %p101 = scmp.eq.s32.totalorder %s100, 0
      %s103 = sadd.s32 %s102, 1
      %s104 = scalar_select %p101, %s102, %s103
      %p107 = pneg %p101
      %p108 = scmp.eq.s32.totalorder %s26, 1
      %p109 = por %p107, %p108
      %p110 = scmp.ne.s32.totalorder %s102, %s105
      %p111 = scmp.eq.s32.totalorder %s26, 0
      %p112 = por %p110, %p111
      %p113 = scmp.ne.s32.totalorder %s102, %s105
      %p114 = scmp.eq.s32.totalorder %s31, 1
      %p115 = por %p113, %p114
      %p116 = scmp.ne.s32.totalorder %s105, %s106
      %p117 = scmp.eq.s32.totalorder %s31, 0
      %p118 = por %p116, %p117
      %p119 = scmp.ne.s32.totalorder %s105, %s106
      %p120 = scmp.eq.s32.totalorder %s32, 1
      %p121 = por %p119, %p120
      %p123 = scmp.ne.s32.totalorder %s106, %s122
      %p124 = scmp.eq.s32.totalorder %s32, 0
      %p125 = por %p123, %p124
      %s127 = sadd.s32 %s126, 1
      %p130 = scmp.eq.s32.totalorder %s26, 1
      %p131 = scmp.ne.s32.totalorder %s126, %s128
      %p132 = scmp.eq.s32.totalorder %s26, 0
      %p133 = por %p131, %p132
      %p134 = scmp.ne.s32.totalorder %s126, %s128
      %p135 = scmp.eq.s32.totalorder %s31, 1
      %p136 = por %p134, %p135
      %p137 = scmp.ne.s32.totalorder %s128, %s129
      %p138 = scmp.eq.s32.totalorder %s31, 0
      %p139 = por %p137, %p138
      %p140 = scmp.ne.s32.totalorder %s128, %s129
      %p141 = scmp.eq.s32.totalorder %s32, 1
      %p142 = por %p140, %p141
      %p144 = scmp.ne.s32.totalorder %s129, %s143
      %p145 = scmp.eq.s32.totalorder %s32, 0
      %p146 = por %p144, %p145
      %s148 = sadd.s32 %s147, 1
      %p151 = scmp.eq.s32.totalorder %s26, 1
      %p152 = scmp.ne.s32.totalorder %s147, %s149
      %p153 = scmp.eq.s32.totalorder %s26, 0
      %p154 = por %p152, %p153
      %p155 = scmp.ne.s32.totalorder %s147, %s149
      %p156 = scmp.eq.s32.totalorder %s31, 1
      %p157 = por %p155, %p156
      %p158 = scmp.ne.s32.totalorder %s149, %s150
      %p159 = scmp.eq.s32.totalorder %s31, 0
      %p160 = por %p158, %p159
      %p161 = scmp.ne.s32.totalorder %s149, %s150
      %p162 = scmp.eq.s32.totalorder %s32, 1
      %p163 = por %p161, %p162
      %p165 = scmp.ne.s32.totalorder %s150, %s164
      %p166 = scmp.eq.s32.totalorder %s32, 0
      %p167 = por %p165, %p166
      %s168 = ssub.s32 %s33, %s45
      %s169 = ssub.s32 %s34, %s41
      %s170 = sor.u32 %s168, %s169
      %p171 = scmp.eq.s32.totalorder %s170, 0
      %s173 = sadd.s32 %s172, 1
      %s174 = scalar_select %p171, %s172, %s173
      %p177 = pneg %p171
      %p178 = scmp.eq.s32.totalorder %s26, 1
      %p179 = por %p177, %p178
      %p180 = scmp.ne.s32.totalorder %s172, %s175
      %p181 = scmp.eq.s32.totalorder %s26, 0
      %p182 = por %p180, %p181
      %p183 = scmp.ne.s32.totalorder %s172, %s175
      %p184 = scmp.eq.s32.totalorder %s31, 1
      %p185 = por %p183, %p184
      %p186 = scmp.ne.s32.totalorder %s175, %s176
      %p187 = scmp.eq.s32.totalorder %s31, 0
      %p188 = por %p186, %p187
      %p189 = scmp.ne.s32.totalorder %s175, %s176
      %p190 = scmp.eq.s32.totalorder %s32, 1
      %p191 = por %p189, %p190
      %p193 = scmp.ne.s32.totalorder %s176, %s192
      %p194 = scmp.eq.s32.totalorder %s32, 0
      %p195 = por %p193, %p194
      %s196 = ssub.s32 %s33, %s45
      %s197 = ssub.s32 %s34, %s41
      %s198 = sor.u32 %s196, %s197
      %p199 = scmp.eq.s32.totalorder %s198, 0
      %s201 = sadd.s32 %s200, 1
      %s202 = scalar_select %p199, %s200, %s201
      %p205 = pneg %p199
      %p206 = scmp.eq.s32.totalorder %s26, 1
      %p207 = por %p205, %p206
      %p208 = scmp.ne.s32.totalorder %s200, %s203
      %p209 = scmp.eq.s32.totalorder %s26, 0
      %p210 = por %p208, %p209
      %p211 = scmp.ne.s32.totalorder %s200, %s203
      %p212 = scmp.eq.s32.totalorder %s31, 1
      %p213 = por %p211, %p212
      %p214 = scmp.ne.s32.totalorder %s203, %s204
      %p215 = scmp.eq.s32.totalorder %s31, 0
      %p216 = por %p214, %p215
      %p217 = scmp.ne.s32.totalorder %s203, %s204
      %p218 = scmp.eq.s32.totalorder %s32, 1
      %p219 = por %p217, %p218
      %p221 = scmp.ne.s32.totalorder %s204, %s220
      %p222 = scmp.eq.s32.totalorder %s32, 0
      %p223 = por %p221, %p222
      %p224 = scmp.le.s32.totalorder 1, %s26
      %p225 = scmp.lt.s32.totalorder %s26, 3
      %p226 = pnand %p224, %p225
      %p227 = pneg %p226
      // Predicated region
      $region9: #{tpu_custom_call.1} parent=5 // pred_check
        _
      $region10: #{tpu_custom_call.1} parent=5 // pred_check_branch
        %229 = sbr.rel (%p226) target = $region12
      $region11: #{tpu_custom_call.1} parent=5 // pred_region
        %s230 = ssub.s32 %s26, 1
        // Predicated region
        $region13: #{tpu_custom_call.1} parent=11 // pred_check
          %p231 = pneg %p139
        $region14: #{tpu_custom_call.1} parent=11 // pred_check_branch
          %233 = sbr.rel (%p231) target = $region16
        $region15: #{tpu_custom_call.1} parent=11 // pred_region
          %s235 = ssub.s32 256, 256
          %236 = vsyncadd [#allocation11], %s235
          %s237 = sshll.u32 [#allocation10], 4
          %s238 = int_to_ptr.vmem [resolvable:$true] %s237
          %243 = dma.hbm_to_vmem [thread:$0]  %s3, 256, %s238, [#allocation11], 64, 64, 4
        $region16: #{tpu_custom_call.1} parent=11 // pred_fallthru
          _
        // Predicated region
        $region17: #{tpu_custom_call.1} parent=11 // pred_check
          %p244 = pneg %p160
        $region18: #{tpu_custom_call.1} parent=11 // pred_check_branch
          %246 = sbr.rel (%p244) target = $region20
        $region19: #{tpu_custom_call.1} parent=11 // pred_region
          %s248 = ssub.s32 256, 256
          %249 = vsyncadd [#allocation11], %s248
          %s250 = sshll.u32 [#allocation12], 4
          %s251 = int_to_ptr.vmem [resolvable:$true] %s250
          %256 = dma.hbm_to_vmem [thread:$0]  %s4, 256, %s251, [#allocation11], 64, 64, 4
        $region20: #{tpu_custom_call.1} parent=11 // pred_fallthru
          _
      $region12: #{tpu_custom_call.1} parent=5 // pred_fallthru
        _
      %p257 = scmp.lt.s32.totalorder %s26, 2
      // Predicated region
      $region21: #{tpu_custom_call.1} parent=5 // pred_check
        %p258 = pneg %p257
      $region22: #{tpu_custom_call.1} parent=5 // pred_check_branch
        %260 = sbr.rel (%p258) target = $region24
      $region23: #{tpu_custom_call.1} parent=5 // pred_region
        // Predicated region
        $region25: #{tpu_custom_call.1} parent=23 // pred_check
          %p261 = pneg %p60
        $region26: #{tpu_custom_call.1} parent=23 // pred_check_branch
          %263 = sbr.rel (%p261) target = $region28
        $region27: #{tpu_custom_call.1} parent=23 // pred_region
          %s264 = sand.u32 %s50, 1
          %s265 = scalar_lea.sflag [#allocation5], %s264
          %s266 = sand.u32 %s50, 1
          %s267 = smul.addr %s266, 4
          %s268 = scalar_lea.vmem [#allocation4], %s267
          %s270 = ssub.s32 64, 64
          %271 = vsyncadd %s265, %s270
          %s272 = sadd.s32 %s34, %s33
          %s273 = smul.addr %s272, 64
          %s274 = scalar_lea.hbm %s0, %s273
          %s276 = sshll.u32 %s268, 4
          %s277 = int_to_ptr.vmem [resolvable:$true] %s276
          %279 = dma.hbm_to_vmem [thread:$0]  %s274, 64, %s277, %s265
        $region28: #{tpu_custom_call.1} parent=23 // pred_fallthru
          _
        // Predicated region
        $region29: #{tpu_custom_call.1} parent=23 // pred_check
          %p280 = pneg %p86
        $region30: #{tpu_custom_call.1} parent=23 // pred_check_branch
          %282 = sbr.rel (%p280) target = $region32
        $region31: #{tpu_custom_call.1} parent=23 // pred_region
          %s283 = sand.u32 %s26, 1
          %s284 = scalar_lea.sflag [#allocation8], %s283
          %s285 = sand.u32 %s76, 1
          %s286 = smul.addr %s285, 4
          %s287 = scalar_lea.vmem [#allocation7], %s286
          %s289 = ssub.s32 64, 64
          %290 = vsyncadd %s284, %s289
          %s291 = smul.addr %s33, 64
          %s292 = scalar_lea.hbm %s1, %s291
          %s294 = sshll.u32 %s287, 4
          %s295 = int_to_ptr.vmem [resolvable:$true] %s294
          %297 = dma.hbm_to_vmem [thread:$0]  %s292, 64, %s295, %s284
        $region32: #{tpu_custom_call.1} parent=23 // pred_fallthru
          _
        // Predicated region
        $region33: #{tpu_custom_call.1} parent=23 // pred_check
          %p298 = pneg %p112
        $region34: #{tpu_custom_call.1} parent=23 // pred_check_branch
          %300 = sbr.rel (%p298) target = $region36
        $region35: #{tpu_custom_call.1} parent=23 // pred_region
          %s301 = sand.u32 %s26, 1
          %s302 = scalar_lea.sflag [#allocation8], %s301
          %s303 = sand.u32 %s102, 1
          %s304 = smul.addr %s303, 4
          %s305 = scalar_lea.vmem [#allocation9], %s304
          %s307 = ssub.s32 64, 64
          %308 = vsyncadd %s302, %s307
          %s309 = smul.addr %s33, 64
          %s310 = scalar_lea.hbm %s2, %s309
          %s312 = sshll.u32 %s305, 4
          %s313 = int_to_ptr.vmem [resolvable:$true] %s312
          %315 = dma.hbm_to_vmem [thread:$0]  %s310, 64, %s313, %s302
        $region36: #{tpu_custom_call.1} parent=23 // pred_fallthru
          _
      $region24: #{tpu_custom_call.1} parent=5 // pred_fallthru
        _
      %p316 = scmp.le.s32.totalorder 1, %s26
      %p317 = scmp.lt.s32.totalorder %s26, 3
      %p318 = pnand %p316, %p317
      %p319 = pneg %p318
      // Predicated region
      $region37: #{tpu_custom_call.1} parent=5 // pred_check
        _
      $region38: #{tpu_custom_call.1} parent=5 // pred_check_branch
        %321 = sbr.rel (%p318) target = $region40
      $region39: #{tpu_custom_call.1} parent=5 // pred_region
        %s322 = ssub.s32 %s26, 1
        %s323 = sand.u32 %s53, 1
        %s324 = scalar_lea.sflag [#allocation5], %s323
        %s325 = sand.u32 %s53, 1
        %s326 = smul.addr %s325, 4
        %s327 = scalar_lea.vmem [#allocation4], %s326
        // Predicated region
        $region41: #{tpu_custom_call.1} parent=39 // pred_check
          %p328 = pneg %p66
        $region42: #{tpu_custom_call.1} parent=39 // pred_check_branch
          %330 = sbr.rel (%p328) target = $region44
        $region43: #{tpu_custom_call.1} parent=39 // pred_region
          %331 = dma.done %s324, 64
        $region44: #{tpu_custom_call.1} parent=39 // pred_fallthru
          _
        %s332 = sand.u32 %s31, 1
        %s333 = scalar_lea.sflag [#allocation8], %s332
        %s334 = sand.u32 %s79, 1
        %s335 = smul.addr %s334, 4
        %s336 = scalar_lea.vmem [#allocation7], %s335
        // Predicated region
        $region45: #{tpu_custom_call.1} parent=39 // pred_check
          %p337 = pneg %p92
        $region46: #{tpu_custom_call.1} parent=39 // pred_check_branch
          %339 = sbr.rel (%p337) target = $region48
        $region47: #{tpu_custom_call.1} parent=39 // pred_region
          %340 = dma.done %s333, 64
        $region48: #{tpu_custom_call.1} parent=39 // pred_fallthru
          _
        %s341 = sand.u32 %s31, 1
        %s342 = scalar_lea.sflag [#allocation8], %s341
        %s343 = sand.u32 %s105, 1
        %s344 = smul.addr %s343, 4
        %s345 = scalar_lea.vmem [#allocation9], %s344
        // Predicated region
        $region49: #{tpu_custom_call.1} parent=39 // pred_check
          %p346 = pneg %p118
        $region50: #{tpu_custom_call.1} parent=39 // pred_check_branch
          %348 = sbr.rel (%p346) target = $region52
        $region51: #{tpu_custom_call.1} parent=39 // pred_region
          %349 = dma.done %s342, 64
        $region52: #{tpu_custom_call.1} parent=39 // pred_fallthru
          _
        // Predicated region
        $region53: #{tpu_custom_call.1} parent=39 // pred_check
          %p350 = pneg %p139
        $region54: #{tpu_custom_call.1} parent=39 // pred_check_branch
          %352 = sbr.rel (%p350) target = $region56
        $region55: #{tpu_custom_call.1} parent=39 // pred_region
          %353 = dma.done [#allocation11], 256
        $region56: #{tpu_custom_call.1} parent=39 // pred_fallthru
          _
        // Predicated region
        $region57: #{tpu_custom_call.1} parent=39 // pred_check
          %p354 = pneg %p160
        $region58: #{tpu_custom_call.1} parent=39 // pred_check_branch
          %356 = sbr.rel (%p354) target = $region60
        $region59: #{tpu_custom_call.1} parent=39 // pred_region
          %357 = dma.done [#allocation11], 256
        $region60: #{tpu_custom_call.1} parent=39 // pred_fallthru
          _
        %s358 = sand.u32 %s53, 1
        %s359 = scalar_lea.sflag [#allocation5], %s358
        %s360 = sand.u32 %s53, 1
        %s361 = smul.addr %s360, 4
        %s362 = scalar_lea.vmem [#allocation4], %s361
        %p363 = pneg %p66
        %p364 = pneg %p63
        %s365 = sand.u32 %s31, 1
        %s366 = scalar_lea.sflag [#allocation8], %s365
        %s367 = sand.u32 %s79, 1
        %s368 = smul.addr %s367, 4
        %s369 = scalar_lea.vmem [#allocation7], %s368
        %p370 = pneg %p92
        %p371 = pneg %p89
        %s372 = sand.u32 %s31, 1
        %s373 = scalar_lea.sflag [#allocation8], %s372
        %s374 = sand.u32 %s105, 1
        %s375 = smul.addr %s374, 4
        %s376 = scalar_lea.vmem [#allocation9], %s375
        %p377 = pneg %p118
        %p378 = pneg %p115
        %p379 = pneg %p139
        %p380 = pneg %p136
        %p381 = pneg %p160
        %p382 = pneg %p157
        %p383 = pneg %p188
        %p384 = pneg %p185
        %s385 = sand.u32 %s175, 1
        %s386 = scalar_lea.sflag [#allocation6], %s385
        %s387 = sand.u32 %s175, 1
        %s388 = smul.addr %s387, 8
        %s389 = scalar_lea.vmem [#allocation13], %s388
        %p390 = pneg %p216
        %p391 = pneg %p213
        %s392 = sand.u32 %s203, 1
        %s393 = scalar_lea.sflag [#allocation15], %s392
        %s394 = sand.u32 %s203, 1
        %s395 = smul.addr %s394, 16
        %s396 = scalar_lea.vmem [#allocation14], %s395
        %p398 = scmp.eq.s32.totalorder %s36, 0
        // Predicated region
        $region61: #{tpu_custom_call.1} parent=39 // pred_check
          %p399 = pneg %p398
        $region62: #{tpu_custom_call.1} parent=39 // pred_check_branch
          %401 = sbr.rel (%p399) target = $region64
        $region63: #{tpu_custom_call.1} parent=39 // pred_region
          %v402 = vld [vmem:[%s336] sm:$0xf]
          %v403 = vld [vmem:[#allocation12] sm:$0xf]
          %v404 = vld [vmem:[#allocation12 + $0x4] sm:$0xf]
          %v405 = vld [vmem:[#allocation12 + $0x8] sm:$0xf]
          %v406 = vld [vmem:[#allocation12 + $0xc] sm:$0xf]
          %v411 = vunpack.c.l.b16 %v403
          %v412 = vunpack.c.l.b16 %v404
          %v413 = vunpack.c.l.b16 %v405
          %v414 = vunpack.c.l.b16 %v406
          %v415 = vpack.c.b16 %v412, %v411
          %v416 = vpack.c.b16 %v414, %v413
          %vm417 = vcmask 261120
          %v419 = vsel %vm417, %v402, 0
          %v422 = vsel %vm417, %v415, 0
          %v425 = vsel %vm417, %v416, 0
          %427 = vmatprep.subr.bf16.mxu0 0
          %428 = vmatpush1.bf16.xpose.msra.mxu0 %v422
          %429 = vmatprep.subr.bf16.mxu0 0
          %430 = vmatpush1.bf16.xpose.msra.mxu0 %v425
          %431 = vmatprep.subr.bf16.mxu0 0
          %432 = vmatpush1.bf16.xpose.msra.mxu0 0
          %433 = vmatprep.subr.bf16.mxu0 0
          %434 = vmatpush1.bf16.xpose.msra.mxu0 0
          %435 = vmatprep.subr.bf16.mxu0 0
          %436 = vmatpush1.bf16.xpose.msra.mxu0 0
          %437 = vmatprep.subr.bf16.mxu0 0
          %438 = vmatpush1.bf16.xpose.msra.mxu0 0
          %439 = vmatprep.subr.bf16.mxu0 0
          %440 = vmatpush1.bf16.xpose.msra.mxu0 0
          %441 = vmatprep.subr.bf16.mxu0 0
          %442 = vmatpush1.bf16.xpose.msra.mxu0 0
          %443 = vmatprep.subr.bf16.mxu0 0
          %444 = vmatpush1.bf16.xpose.msra.mxu0 0
          %445 = vmatprep.subr.bf16.mxu0 0
          %446 = vmatpush1.bf16.xpose.msra.mxu0 0
          %447 = vmatprep.subr.bf16.mxu0 0
          %448 = vmatpush1.bf16.xpose.msra.mxu0 0
          %449 = vmatprep.subr.bf16.mxu0 0
          %450 = vmatpush1.bf16.xpose.msra.mxu0 0
          %451 = vmatprep.subr.bf16.mxu0 0
          %452 = vmatpush1.bf16.xpose.msra.mxu0 0
          %453 = vmatprep.subr.bf16.mxu0 0
          %454 = vmatpush1.bf16.xpose.msra.mxu0 0
          %455 = vmatprep.subr.bf16.mxu0 0
          %456 = vmatpush1.bf16.xpose.msra.mxu0 0
          %457 = vmatprep.subr.bf16.mxu0 0
          %458 = vmatpush1.bf16.xpose.msra.mxu0 0
          %459 = vmatprep.mubr.bf16.mxu0 0
          %460 = vmatmul.mubr.bf16.gmra.mrb[0].mxu0 %v419
          %v461 = vpop.f32.mrb[0].mxu0
          %v462 = vadd.f32 0.0, %v461
          %v463 = vpop.f32.mrb[0].mxu0
          %v464 = vpop.f32.mrb[0].mxu0
          %v465 = vpop.f32.mrb[0].mxu0
          %466 = vdwg.mxu0
          %v467 = vld [vmem:[%s345] sm:$0xf]
          %v469 = vsel %vm417, %v467, 0
          %471 = vmatprep.subr.bf16.mxu0 0
          %472 = vmatpush1.bf16.xpose.msra.mxu0 %v422
          %473 = vmatprep.subr.bf16.mxu0 0
          %474 = vmatpush1.bf16.xpose.msra.mxu0 %v425
          %475 = vmatprep.subr.bf16.mxu0 0
          %476 = vmatpush1.bf16.xpose.msra.mxu0 0
          %477 = vmatprep.subr.bf16.mxu0 0
          %478 = vmatpush1.bf16.xpose.msra.mxu0 0
          %479 = vmatprep.subr.bf16.mxu0 0
          %480 = vmatpush1.bf16.xpose.msra.mxu0 0
          %481 = vmatprep.subr.bf16.mxu0 0
          %482 = vmatpush1.bf16.xpose.msra.mxu0 0
          %483 = vmatprep.subr.bf16.mxu0 0
          %484 = vmatpush1.bf16.xpose.msra.mxu0 0
          %485 = vmatprep.subr.bf16.mxu0 0
          %486 = vmatpush1.bf16.xpose.msra.mxu0 0
          %487 = vmatprep.subr.bf16.mxu0 0
          %488 = vmatpush1.bf16.xpose.msra.mxu0 0
          %489 = vmatprep.subr.bf16.mxu0 0
          %490 = vmatpush1.bf16.xpose.msra.mxu0 0
          %491 = vmatprep.subr.bf16.mxu0 0
          %492 = vmatpush1.bf16.xpose.msra.mxu0 0
          %493 = vmatprep.subr.bf16.mxu0 0
          %494 = vmatpush1.bf16.xpose.msra.mxu0 0
          %495 = vmatprep.subr.bf16.mxu0 0
          %496 = vmatpush1.bf16.xpose.msra.mxu0 0
          %497 = vmatprep.subr.bf16.mxu0 0
          %498 = vmatpush1.bf16.xpose.msra.mxu0 0
          %499 = vmatprep.subr.bf16.mxu0 0
          %500 = vmatpush1.bf16.xpose.msra.mxu0 0
          %501 = vmatprep.subr.bf16.mxu0 0
          %502 = vmatpush1.bf16.xpose.msra.mxu0 0
          %503 = vmatprep.mubr.bf16.mxu0 0
          %504 = vmatmul.mubr.bf16.gmra.mrb[0].mxu0 %v469
          %v505 = vpop.f32.mrb[0].mxu0
          %v506 = vadd.f32 0.0, %v505
          %v507 = vpop.f32.mrb[0].mxu0
          %v508 = vpop.f32.mrb[0].mxu0
          %v509 = vpop.f32.mrb[0].mxu0
          %510 = vdwg.mxu0
          %v511 = vpack.c.bf16 %v462, %v462
          %vm512 = vcmask 257024
          %513 = vst.msk [vmem:[#allocation2] sm:$0xf] %vm512, %v511
          %v514 = vpack.c.bf16 %v506, %v506
          %515 = vst.msk [vmem:[#allocation3] sm:$0xf] %vm512, %v514
        $region64: #{tpu_custom_call.1} parent=39 // pred_fallthru
          _
        %v516 = vld [vmem:[%s327] sm:$0xf]
        %v517 = vld [vmem:[#allocation10] sm:$0xf]
        %v518 = vld [vmem:[#allocation10 + $0x4] sm:$0xf]
        %v519 = vld [vmem:[#allocation10 + $0x8] sm:$0xf]
        %v520 = vld [vmem:[#allocation10 + $0xc] sm:$0xf]
        %v525 = vunpack.c.l.b16 %v517
        %v526 = vunpack.c.l.b16 %v518
        %v527 = vunpack.c.l.b16 %v519
        %v528 = vunpack.c.l.b16 %v520
        %v529 = vpack.c.b16 %v526, %v525
        %v530 = vpack.c.b16 %v528, %v527
        %vm531 = vcmask 261120
        %v533 = vsel %vm531, %v516, 0
        %v536 = vsel %vm531, %v529, 0
        %v539 = vsel %vm531, %v530, 0
        %541 = vmatprep.subr.bf16.mxu0 0
        %542 = vmatpush1.bf16.xpose.msra.mxu0 %v536
        %543 = vmatprep.subr.bf16.mxu0 0
        %544 = vmatpush1.bf16.xpose.msra.mxu0 %v539
        %545 = vmatprep.subr.bf16.mxu0 0
        %546 = vmatpush1.bf16.xpose.msra.mxu0 0
        %547 = vmatprep.subr.bf16.mxu0 0
        %548 = vmatpush1.bf16.xpose.msra.mxu0 0
        %549 = vmatprep.subr.bf16.mxu0 0
        %550 = vmatpush1.bf16.xpose.msra.mxu0 0
        %551 = vmatprep.subr.bf16.mxu0 0
        %552 = vmatpush1.bf16.xpose.msra.mxu0 0
        %553 = vmatprep.subr.bf16.mxu0 0
        %554 = vmatpush1.bf16.xpose.msra.mxu0 0
        %555 = vmatprep.subr.bf16.mxu0 0
        %556 = vmatpush1.bf16.xpose.msra.mxu0 0
        %557 = vmatprep.subr.bf16.mxu0 0
        %558 = vmatpush1.bf16.xpose.msra.mxu0 0
        %559 = vmatprep.subr.bf16.mxu0 0
        %560 = vmatpush1.bf16.xpose.msra.mxu0 0
        %561 = vmatprep.subr.bf16.mxu0 0
        %562 = vmatpush1.bf16.xpose.msra.mxu0 0
        %563 = vmatprep.subr.bf16.mxu0 0
        %564 = vmatpush1.bf16.xpose.msra.mxu0 0
        %565 = vmatprep.subr.bf16.mxu0 0
        %566 = vmatpush1.bf16.xpose.msra.mxu0 0
        %567 = vmatprep.subr.bf16.mxu0 0
        %568 = vmatpush1.bf16.xpose.msra.mxu0 0
        %569 = vmatprep.subr.bf16.mxu0 0
        %570 = vmatpush1.bf16.xpose.msra.mxu0 0
        %571 = vmatprep.subr.bf16.mxu0 0
        %572 = vmatpush1.bf16.xpose.msra.mxu0 0
        %573 = vmatprep.mubr.bf16.mxu0 0
        %574 = vmatmul.mubr.bf16.gmra.mrb[0].mxu0 %v533
        %v575 = vpop.f32.mrb[0].mxu0
        %v576 = vadd.f32 0.0, %v575
        %v577 = vpop.f32.mrb[0].mxu0
        %v578 = vpop.f32.mrb[0].mxu0
        %v579 = vpop.f32.mrb[0].mxu0
        %580 = vdwg.mxu0
        %v581 = vpack.c.bf16 %v576, %v576
        %v582 = vld [vmem:[#allocation2] sm:$0xf]
        %v583 = vld [vmem:[#allocation3] sm:$0xf]
        %vm584 = vcmask 64512
        %v586 = vsel %vm584, %v581, 0
        %v589 = vsel %vm584, %v582, 0
        %591 = vmatprep.subr.bf16.mxu0 0
        %592 = vmatpush1.bf16.xpose.msra.mxu0 %v589
        %593 = vmatprep.subr.bf16.mxu0 0
        %594 = vmatpush1.bf16.xpose.msra.mxu0 0
        %595 = vmatprep.subr.bf16.mxu0 0
        %596 = vmatpush1.bf16.xpose.msra.mxu0 0
        %597 = vmatprep.subr.bf16.mxu0 0
        %598 = vmatpush1.bf16.xpose.msra.mxu0 0
        %599 = vmatprep.subr.bf16.mxu0 0
        %600 = vmatpush1.bf16.xpose.msra.mxu0 0
        %601 = vmatprep.subr.bf16.mxu0 0
        %602 = vmatpush1.bf16.xpose.msra.mxu0 0
        %603 = vmatprep.subr.bf16.mxu0 0
        %604 = vmatpush1.bf16.xpose.msra.mxu0 0
        %605 = vmatprep.subr.bf16.mxu0 0
        %606 = vmatpush1.bf16.xpose.msra.mxu0 0
        %607 = vmatprep.subr.bf16.mxu0 0
        %608 = vmatpush1.bf16.xpose.msra.mxu0 0
        %609 = vmatprep.subr.bf16.mxu0 0
        %610 = vmatpush1.bf16.xpose.msra.mxu0 0
        %611 = vmatprep.subr.bf16.mxu0 0
        %612 = vmatpush1.bf16.xpose.msra.mxu0 0
        %613 = vmatprep.subr.bf16.mxu0 0
        %614 = vmatpush1.bf16.xpose.msra.mxu0 0
        %615 = vmatprep.subr.bf16.mxu0 0
        %616 = vmatpush1.bf16.xpose.msra.mxu0 0
        %617 = vmatprep.subr.bf16.mxu0 0
        %618 = vmatpush1.bf16.xpose.msra.mxu0 0
        %619 = vmatprep.subr.bf16.mxu0 0
        %620 = vmatpush1.bf16.xpose.msra.mxu0 0
        %621 = vmatprep.subr.bf16.mxu0 0
        %622 = vmatpush1.bf16.xpose.msra.mxu0 0
        %623 = vmatprep.mubr.bf16.mxu0 0
        %624 = vmatmul.mubr.bf16.gmra.mrb[0].mxu0 %v586
        %v625 = vpop.f32.mrb[0].mxu0
        %v626 = vadd.f32 0.0, %v625
        %v627 = vpop.f32.mrb[0].mxu0
        %v628 = vpop.f32.mrb[0].mxu0
        %v629 = vpop.f32.mrb[0].mxu0
        %630 = vdwg.mxu0
        %v631 = vsel %vm584, %v626, -inf
        %632 = vmax.xlane.f32.xlu0 %v631
        %v633 = vpop.xlane.xlu0 %632
        %v634 = vsub.f32 %v626, %v633
        %v635 = vmul.f32 %v634, 1.442695
        %v636 = vpow.pop %v635
        %v637 = vsel %vm584, %v636, 0.0
        %638 = vadd.xlane.f32.xlu0 %v637
        %v639 = vpop.xlane.xlu0 %638
        %v640 = vrcp.pop %v639
        %v641 = vmul.f32 %v636, %v640
        %v642 = vpack.c.bf16 %v641, %v641
        %vm643 = vcmask 60416
        %644 = vst.msk [vmem:[%s396] sm:$0xf] %vm643, %v642
        %v646 = vsel %vm584, %v642, 0
        %vm648 = vcmask 1043456
        %v650 = vsel %vm648, %v583, 0
        %652 = vmatprep.subr.bf16.mxu0 0
        %653 = vmatpush1.bf16.msra.mxu0 %v650
        %654 = vmatprep.subr.bf16.mxu0 0
        %655 = vmatpush1.bf16.msra.mxu0 0
        %656 = vmatprep.subr.bf16.mxu0 0
        %657 = vmatpush1.bf16.msra.mxu0 0
        %658 = vmatprep.subr.bf16.mxu0 0
        %659 = vmatpush1.bf16.msra.mxu0 0
        %660 = vmatprep.subr.bf16.mxu0 0
        %661 = vmatpush1.bf16.msra.mxu0 0
        %662 = vmatprep.subr.bf16.mxu0 0
        %663 = vmatpush1.bf16.msra.mxu0 0
        %664 = vmatprep.subr.bf16.mxu0 0
        %665 = vmatpush1.bf16.msra.mxu0 0
        %666 = vmatprep.subr.bf16.mxu0 0
        %667 = vmatpush1.bf16.msra.mxu0 0
        %668 = vmatprep.subr.bf16.mxu0 0
        %669 = vmatpush1.bf16.msra.mxu0 0
        %670 = vmatprep.subr.bf16.mxu0 0
        %671 = vmatpush1.bf16.msra.mxu0 0
        %672 = vmatprep.subr.bf16.mxu0 0
        %673 = vmatpush1.bf16.msra.mxu0 0
        %674 = vmatprep.subr.bf16.mxu0 0
        %675 = vmatpush1.bf16.msra.mxu0 0
        %676 = vmatprep.subr.bf16.mxu0 0
        %677 = vmatpush1.bf16.msra.mxu0 0
        %678 = vmatprep.subr.bf16.mxu0 0
        %679 = vmatpush1.bf16.msra.mxu0 0
        %680 = vmatprep.subr.bf16.mxu0 0
        %681 = vmatpush1.bf16.msra.mxu0 0
        %682 = vmatprep.subr.bf16.mxu0 0
        %683 = vmatpush1.bf16.msra.mxu0 0
        %684 = vmatprep.mubr.bf16.mxu0 0
        %685 = vmatmul.mubr.bf16.gmra.mrb[0].mxu0 %v646
        %v686 = vpop.f32.mrb[0].mxu0
        %v687 = vadd.f32 0.0, %v686
        %v688 = vpop.f32.mrb[0].mxu0
        %v689 = vpop.f32.mrb[0].mxu0
        %v690 = vpop.f32.mrb[0].mxu0
        %691 = vdwg.mxu0
        %693 = vrot.lane.b32.xlu0 %v581, 120
        %v694 = vpop.permute.xlu0 %693
        %v696 = vunpack.c.l.b16 %v582
        %v697 = vpack.c.b16 %v696, %v696
        %698 = vrot.lane.b32.xlu0 %v697, 120
        %v699 = vpop.permute.xlu0 %698
        %v701 = vsel %vm584, %v694, 0
        %v704 = vsel %vm584, %v699, 0
        %706 = vmatprep.subr.bf16.mxu0 0
        %707 = vmatpush1.bf16.xpose.msra.mxu0 %v704
        %708 = vmatprep.subr.bf16.mxu0 0
        %709 = vmatpush1.bf16.xpose.msra.mxu0 0
        %710 = vmatprep.subr.bf16.mxu0 0
        %711 = vmatpush1.bf16.xpose.msra.mxu0 0
        %712 = vmatprep.subr.bf16.mxu0 0
        %713 = vmatpush1.bf16.xpose.msra.mxu0 0
        %714 = vmatprep.subr.bf16.mxu0 0
        %715 = vmatpush1.bf16.xpose.msra.mxu0 0
        %716 = vmatprep.subr.bf16.mxu0 0
        %717 = vmatpush1.bf16.xpose.msra.mxu0 0
        %718 = vmatprep.subr.bf16.mxu0 0
        %719 = vmatpush1.bf16.xpose.msra.mxu0 0
        %720 = vmatprep.subr.bf16.mxu0 0
        %721 = vmatpush1.bf16.xpose.msra.mxu0 0
        %722 = vmatprep.subr.bf16.mxu0 0
        %723 = vmatpush1.bf16.xpose.msra.mxu0 0
        %724 = vmatprep.subr.bf16.mxu0 0
        %725 = vmatpush1.bf16.xpose.msra.mxu0 0
        %726 = vmatprep.subr.bf16.mxu0 0
        %727 = vmatpush1.bf16.xpose.msra.mxu0 0
        %728 = vmatprep.subr.bf16.mxu0 0
        %729 = vmatpush1.bf16.xpose.msra.mxu0 0
        %730 = vmatprep.subr.bf16.mxu0 0
        %731 = vmatpush1.bf16.xpose.msra.mxu0 0
        %732 = vmatprep.subr.bf16.mxu0 0
        %733 = vmatpush1.bf16.xpose.msra.mxu0 0
        %734 = vmatprep.subr.bf16.mxu0 0
        %735 = vmatpush1.bf16.xpose.msra.mxu0 0
        %736 = vmatprep.subr.bf16.mxu0 0
        %737 = vmatpush1.bf16.xpose.msra.mxu0 0
        %738 = vmatprep.mubr.bf16.mxu0 0
        %739 = vmatmul.mubr.bf16.gmra.mrb[0].mxu0 %v701
        %v740 = vpop.f32.mrb[0].mxu0
        %v741 = vadd.f32 0.0, %v740
        %v742 = vpop.f32.mrb[0].mxu0
        %v743 = vpop.f32.mrb[0].mxu0
        %v744 = vpop.f32.mrb[0].mxu0
        %745 = vdwg.mxu0
        %v746 = vsel %vm584, %v741, -inf
        %747 = vmax.xlane.f32.xlu0 %v746
        %v748 = vpop.xlane.xlu0 %747
        %v749 = vsub.f32 %v741, %v748
        %v750 = vmul.f32 %v749, 1.442695
        %v751 = vpow.pop %v750
        %v752 = vsel %vm584, %v751, 0.0
        %753 = vadd.xlane.f32.xlu0 %v752
        %v754 = vpop.xlane.xlu0 %753
        %v755 = vrcp.pop %v754
        %v756 = vmul.f32 %v751, %v755
        %v757 = vpack.c.bf16 %v756, %v756
        %s758 = scalar_lea.vmem %s396, 4 [#allocation14]
        %759 = vst.msk [vmem:[%s758] sm:$0xf] %vm643, %v757
        %v761 = vunpack.c.l.b16 %v583
        %v762 = vpack.c.b16 %v761, %v761
        %763 = vrot.lane.b32.xlu0 %v762, 120
        %v764 = vpop.permute.xlu0 %763
        %v766 = vsel %vm584, %v757, 0
        %v769 = vsel %vm648, %v764, 0
        %771 = vmatprep.subr.bf16.mxu0 0
        %772 = vmatpush1.bf16.msra.mxu0 %v769
        %773 = vmatprep.subr.bf16.mxu0 0
        %774 = vmatpush1.bf16.msra.mxu0 0
        %775 = vmatprep.subr.bf16.mxu0 0
        %776 = vmatpush1.bf16.msra.mxu0 0
        %777 = vmatprep.subr.bf16.mxu0 0
        %778 = vmatpush1.bf16.msra.mxu0 0
        %779 = vmatprep.subr.bf16.mxu0 0
        %780 = vmatpush1.bf16.msra.mxu0 0
        %781 = vmatprep.subr.bf16.mxu0 0
        %782 = vmatpush1.bf16.msra.mxu0 0
        %783 = vmatprep.subr.bf16.mxu0 0
        %784 = vmatpush1.bf16.msra.mxu0 0
        %785 = vmatprep.subr.bf16.mxu0 0
        %786 = vmatpush1.bf16.msra.mxu0 0
        %787 = vmatprep.subr.bf16.mxu0 0
        %788 = vmatpush1.bf16.msra.mxu0 0
        %789 = vmatprep.subr.bf16.mxu0 0
        %790 = vmatpush1.bf16.msra.mxu0 0
        %791 = vmatprep.subr.bf16.mxu0 0
        %792 = vmatpush1.bf16.msra.mxu0 0
        %793 = vmatprep.subr.bf16.mxu0 0
        %794 = vmatpush1.bf16.msra.mxu0 0
        %795 = vmatprep.subr.bf16.mxu0 0
        %796 = vmatpush1.bf16.msra.mxu0 0
        %797 = vmatprep.subr.bf16.mxu0 0
        %798 = vmatpush1.bf16.msra.mxu0 0
        %799 = vmatprep.subr.bf16.mxu0 0
        %800 = vmatpush1.bf16.msra.mxu0 0
        %801 = vmatprep.subr.bf16.mxu0 0
        %802 = vmatpush1.bf16.msra.mxu0 0
        %803 = vmatprep.mubr.bf16.mxu0 0
        %804 = vmatmul.mubr.bf16.gmra.mrb[0].mxu0 %v766
        %v805 = vpop.f32.mrb[0].mxu0
        %v806 = vadd.f32 0.0, %v805
        %v807 = vpop.f32.mrb[0].mxu0
        %v808 = vpop.f32.mrb[0].mxu0
        %v809 = vpop.f32.mrb[0].mxu0
        %810 = vdwg.mxu0
        %811 = vrot.lane.b32.xlu0 %v581, 112
        %v812 = vpop.permute.xlu0 %811
        %813 = vrot.lane.b32.xlu0 %v697, 112
        %v814 = vpop.permute.xlu0 %813
        %v816 = vsel %vm584, %v812, 0
        %v819 = vsel %vm584, %v814, 0
        %821 = vmatprep.subr.bf16.mxu0 0
        %822 = vmatpush1.bf16.xpose.msra.mxu0 %v819
        %823 = vmatprep.subr.bf16.mxu0 0
        %824 = vmatpush1.bf16.xpose.msra.mxu0 0
        %825 = vmatprep.subr.bf16.mxu0 0
        %826 = vmatpush1.bf16.xpose.msra.mxu0 0
        %827 = vmatprep.subr.bf16.mxu0 0
        %828 = vmatpush1.bf16.xpose.msra.mxu0 0
        %829 = vmatprep.subr.bf16.mxu0 0
        %830 = vmatpush1.bf16.xpose.msra.mxu0 0
        %831 = vmatprep.subr.bf16.mxu0 0
        %832 = vmatpush1.bf16.xpose.msra.mxu0 0
        %833 = vmatprep.subr.bf16.mxu0 0
        %834 = vmatpush1.bf16.xpose.msra.mxu0 0
        %835 = vmatprep.subr.bf16.mxu0 0
        %836 = vmatpush1.bf16.xpose.msra.mxu0 0
        %837 = vmatprep.subr.bf16.mxu0 0
        %838 = vmatpush1.bf16.xpose.msra.mxu0 0
        %839 = vmatprep.subr.bf16.mxu0 0
        %840 = vmatpush1.bf16.xpose.msra.mxu0 0
        %841 = vmatprep.subr.bf16.mxu0 0
        %842 = vmatpush1.bf16.xpose.msra.mxu0 0
        %843 = vmatprep.subr.bf16.mxu0 0
        %844 = vmatpush1.bf16.xpose.msra.mxu0 0
        %845 = vmatprep.subr.bf16.mxu0 0
        %846 = vmatpush1.bf16.xpose.msra.mxu0 0
        %847 = vmatprep.subr.bf16.mxu0 0
        %848 = vmatpush1.bf16.xpose.msra.mxu0 0
        %849 = vmatprep.subr.bf16.mxu0 0
        %850 = vmatpush1.bf16.xpose.msra.mxu0 0
        %851 = vmatprep.subr.bf16.mxu0 0
        %852 = vmatpush1.bf16.xpose.msra.mxu0 0
        %853 = vmatprep.mubr.bf16.mxu0 0
        %854 = vmatmul.mubr.bf16.gmra.mrb[0].mxu0 %v816
        %v855 = vpop.f32.mrb[0].mxu0
        %v856 = vadd.f32 0.0, %v855
        %v857 = vpop.f32.mrb[0].mxu0
        %v858 = vpop.f32.mrb[0].mxu0
        %v859 = vpop.f32.mrb[0].mxu0
        %860 = vdwg.mxu0
        %v861 = vsel %vm584, %v856, -inf
        %862 = vmax.xlane.f32.xlu0 %v861
        %v863 = vpop.xlane.xlu0 %862
        %v864 = vsub.f32 %v856, %v863
        %v865 = vmul.f32 %v864, 1.442695
        %v866 = vpow.pop %v865
        %v867 = vsel %vm584, %v866, 0.0
        %868 = vadd.xlane.f32.xlu0 %v867
        %v869 = vpop.xlane.xlu0 %868
        %v870 = vrcp.pop %v869
        %v871 = vmul.f32 %v866, %v870
        %v872 = vpack.c.bf16 %v871, %v871
        %s873 = scalar_lea.vmem %s396, 8 [#allocation14]
        %874 = vst.msk [vmem:[%s873] sm:$0xf] %vm643, %v872
        %875 = vrot.lane.b32.xlu0 %v762, 112
        %v876 = vpop.permute.xlu0 %875
        %v878 = vsel %vm584, %v872, 0
        %v881 = vsel %vm648, %v876, 0
        %883 = vmatprep.subr.bf16.mxu0 0
        %884 = vmatpush1.bf16.msra.mxu0 %v881
        %885 = vmatprep.subr.bf16.mxu0 0
        %886 = vmatpush1.bf16.msra.mxu0 0
        %887 = vmatprep.subr.bf16.mxu0 0
        %888 = vmatpush1.bf16.msra.mxu0 0
        %889 = vmatprep.subr.bf16.mxu0 0
        %890 = vmatpush1.bf16.msra.mxu0 0
        %891 = vmatprep.subr.bf16.mxu0 0
        %892 = vmatpush1.bf16.msra.mxu0 0
        %893 = vmatprep.subr.bf16.mxu0 0
        %894 = vmatpush1.bf16.msra.mxu0 0
        %895 = vmatprep.subr.bf16.mxu0 0
        %896 = vmatpush1.bf16.msra.mxu0 0
        %897 = vmatprep.subr.bf16.mxu0 0
        %898 = vmatpush1.bf16.msra.mxu0 0
        %899 = vmatprep.subr.bf16.mxu0 0
        %900 = vmatpush1.bf16.msra.mxu0 0
        %901 = vmatprep.subr.bf16.mxu0 0
        %902 = vmatpush1.bf16.msra.mxu0 0
        %903 = vmatprep.subr.bf16.mxu0 0
        %904 = vmatpush1.bf16.msra.mxu0 0
        %905 = vmatprep.subr.bf16.mxu0 0
        %906 = vmatpush1.bf16.msra.mxu0 0
        %907 = vmatprep.subr.bf16.mxu0 0
        %908 = vmatpush1.bf16.msra.mxu0 0
        %909 = vmatprep.subr.bf16.mxu0 0
        %910 = vmatpush1.bf16.msra.mxu0 0
        %911 = vmatprep.subr.bf16.mxu0 0
        %912 = vmatpush1.bf16.msra.mxu0 0
        %913 = vmatprep.subr.bf16.mxu0 0
        %914 = vmatpush1.bf16.msra.mxu0 0
        %915 = vmatprep.mubr.bf16.mxu0 0
        %916 = vmatmul.mubr.bf16.gmra.mrb[0].mxu0 %v878
        %v917 = vpop.f32.mrb[0].mxu0
        %v918 = vadd.f32 0.0, %v917
        %v919 = vpop.f32.mrb[0].mxu0
        %v920 = vpop.f32.mrb[0].mxu0
        %v921 = vpop.f32.mrb[0].mxu0
        %922 = vdwg.mxu0
        %923 = vrot.lane.b32.xlu0 %v581, 104
        %v924 = vpop.permute.xlu0 %923
        %925 = vrot.lane.b32.xlu0 %v697, 104
        %v926 = vpop.permute.xlu0 %925
        %v928 = vsel %vm584, %v924, 0
        %v931 = vsel %vm584, %v926, 0
        %933 = vmatprep.subr.bf16.mxu0 0
        %934 = vmatpush1.bf16.xpose.msra.mxu0 %v931
        %935 = vmatprep.subr.bf16.mxu0 0
        %936 = vmatpush1.bf16.xpose.msra.mxu0 0
        %937 = vmatprep.subr.bf16.mxu0 0
        %938 = vmatpush1.bf16.xpose.msra.mxu0 0
        %939 = vmatprep.subr.bf16.mxu0 0
        %940 = vmatpush1.bf16.xpose.msra.mxu0 0
        %941 = vmatprep.subr.bf16.mxu0 0
        %942 = vmatpush1.bf16.xpose.msra.mxu0 0
        %943 = vmatprep.subr.bf16.mxu0 0
        %944 = vmatpush1.bf16.xpose.msra.mxu0 0
        %945 = vmatprep.subr.bf16.mxu0 0
        %946 = vmatpush1.bf16.xpose.msra.mxu0 0
        %947 = vmatprep.subr.bf16.mxu0 0
        %948 = vmatpush1.bf16.xpose.msra.mxu0 0
        %949 = vmatprep.subr.bf16.mxu0 0
        %950 = vmatpush1.bf16.xpose.msra.mxu0 0
        %951 = vmatprep.subr.bf16.mxu0 0
        %952 = vmatpush1.bf16.xpose.msra.mxu0 0
        %953 = vmatprep.subr.bf16.mxu0 0
        %954 = vmatpush1.bf16.xpose.msra.mxu0 0
        %955 = vmatprep.subr.bf16.mxu0 0
        %956 = vmatpush1.bf16.xpose.msra.mxu0 0
        %957 = vmatprep.subr.bf16.mxu0 0
        %958 = vmatpush1.bf16.xpose.msra.mxu0 0
        %959 = vmatprep.subr.bf16.mxu0 0
        %960 = vmatpush1.bf16.xpose.msra.mxu0 0
        %961 = vmatprep.subr.bf16.mxu0 0
        %962 = vmatpush1.bf16.xpose.msra.mxu0 0
        %963 = vmatprep.subr.bf16.mxu0 0
        %964 = vmatpush1.bf16.xpose.msra.mxu0 0
        %965 = vmatprep.mubr.bf16.mxu0 0
        %966 = vmatmul.mubr.bf16.gmra.mrb[0].mxu0 %v928
        %v967 = vpop.f32.mrb[0].mxu0
        %v968 = vadd.f32 0.0, %v967
        %v969 = vpop.f32.mrb[0].mxu0
        %v970 = vpop.f32.mrb[0].mxu0
        %v971 = vpop.f32.mrb[0].mxu0
        %972 = vdwg.mxu0
        %v973 = vsel %vm584, %v968, -inf
        %974 = vmax.xlane.f32.xlu0 %v973
        %v975 = vpop.xlane.xlu0 %974
        %v976 = vsub.f32 %v968, %v975
        %v977 = vmul.f32 %v976, 1.442695
        %v978 = vpow.pop %v977
        %v979 = vsel %vm584, %v978, 0.0
        %980 = vadd.xlane.f32.xlu0 %v979
        %v981 = vpop.xlane.xlu0 %980
        %v982 = vrcp.pop %v981
        %v983 = vmul.f32 %v978, %v982
        %v984 = vpack.c.bf16 %v983, %v983
        %s985 = scalar_lea.vmem %s396, 12 [#allocation14]
        %986 = vst.msk [vmem:[%s985] sm:$0xf] %vm643, %v984
        %987 = vrot.lane.b32.xlu0 %v762, 104
        %v988 = vpop.permute.xlu0 %987
        %v990 = vsel %vm584, %v984, 0
        %v993 = vsel %vm648, %v988, 0
        %995 = vmatprep.subr.bf16.mxu0 0
        %996 = vmatpush1.bf16.msra.mxu0 %v993
        %997 = vmatprep.subr.bf16.mxu0 0
        %998 = vmatpush1.bf16.msra.mxu0 0
        %999 = vmatprep.subr.bf16.mxu0 0
        %1000 = vmatpush1.bf16.msra.mxu0 0
        %1001 = vmatprep.subr.bf16.mxu0 0
        %1002 = vmatpush1.bf16.msra.mxu0 0
        %1003 = vmatprep.subr.bf16.mxu0 0
        %1004 = vmatpush1.bf16.msra.mxu0 0
        %1005 = vmatprep.subr.bf16.mxu0 0
        %1006 = vmatpush1.bf16.msra.mxu0 0
        %1007 = vmatprep.subr.bf16.mxu0 0
        %1008 = vmatpush1.bf16.msra.mxu0 0
        %1009 = vmatprep.subr.bf16.mxu0 0
        %1010 = vmatpush1.bf16.msra.mxu0 0
        %1011 = vmatprep.subr.bf16.mxu0 0
        %1012 = vmatpush1.bf16.msra.mxu0 0
        %1013 = vmatprep.subr.bf16.mxu0 0
        %1014 = vmatpush1.bf16.msra.mxu0 0
        %1015 = vmatprep.subr.bf16.mxu0 0
        %1016 = vmatpush1.bf16.msra.mxu0 0
        %1017 = vmatprep.subr.bf16.mxu0 0
        %1018 = vmatpush1.bf16.msra.mxu0 0
        %1019 = vmatprep.subr.bf16.mxu0 0
        %1020 = vmatpush1.bf16.msra.mxu0 0
        %1021 = vmatprep.subr.bf16.mxu0 0
        %1022 = vmatpush1.bf16.msra.mxu0 0
        %1023 = vmatprep.subr.bf16.mxu0 0
        %1024 = vmatpush1.bf16.msra.mxu0 0
        %1025 = vmatprep.subr.bf16.mxu0 0
        %1026 = vmatpush1.bf16.msra.mxu0 0
        %1027 = vmatprep.mubr.bf16.mxu0 0
        %1028 = vmatmul.mubr.bf16.gmra.mrb[0].mxu0 %v990
        %v1029 = vpop.f32.mrb[0].mxu0
        %v1030 = vadd.f32 0.0, %v1029
        %v1031 = vpop.f32.mrb[0].mxu0
        %v1032 = vpop.f32.mrb[0].mxu0
        %v1033 = vpop.f32.mrb[0].mxu0
        %1034 = vdwg.mxu0
        %1036 = vrot.lane.b32.xlu0 %v806, 8
        %v1037 = vpop.permute.xlu0 %1036
        %1040 = vrot.lane.b32.xlu0 %v918, 16
        %v1041 = vpop.permute.xlu0 %1040
        %1044 = vrot.lane.b32.xlu0 %v1030, 24
        %v1045 = vpop.permute.xlu0 %1044
        %v1047 = vsel %vm584, %v687, %v1037
        %vm1048 = vcmask 130048
        %v1049 = vsel %vm1048, %v1047, %v1041
        %vm1050 = vcmask 195584
        %v1051 = vsel %vm1050, %v1049, %v1045
        %1052 = vst.msk [vmem:[%s389] sm:$0xff] %vm531, %v1051
        %s1053 = sand.u32 %s175, 1
        %s1054 = scalar_lea.sflag [#allocation6], %s1053
        %s1055 = sand.u32 %s175, 1
        %s1056 = smul.addr %s1055, 8
        %s1057 = scalar_lea.vmem [#allocation13], %s1056
        %s1058 = sand.u32 %s203, 1
        %s1059 = scalar_lea.sflag [#allocation15], %s1058
        %s1060 = sand.u32 %s203, 1
        %s1061 = smul.addr %s1060, 16
        %s1062 = scalar_lea.vmem [#allocation14], %s1061
        // Predicated region
        $region65: #{tpu_custom_call.1} parent=39 // pred_check
          %p1063 = pneg %p185
        $region66: #{tpu_custom_call.1} parent=39 // pred_check_branch
          %1065 = sbr.rel (%p1063) target = $region68
        $region67: #{tpu_custom_call.1} parent=39 // pred_region
          %s1067 = ssub.s32 128, 128
          %1068 = vsyncadd %s1054, %s1067
          %s1069 = sadd.s32 %s36, %s35
          %s1070 = smul.addr %s1069, 128
          %s1071 = scalar_lea.hbm %s5, %s1070
          %s1073 = sshll.u32 %s1057, 4
          %s1074 = int_to_ptr.vmem [resolvable:$true] %s1073
          %1076 = dma.vmem_to_hbm [thread:$0]  %s1074, 128, %s1071, %s1054
        $region68: #{tpu_custom_call.1} parent=39 // pred_fallthru
          _
        // Predicated region
        $region69: #{tpu_custom_call.1} parent=39 // pred_check
          %p1077 = pneg %p213
        $region70: #{tpu_custom_call.1} parent=39 // pred_check_branch
          %1079 = sbr.rel (%p1077) target = $region72
        $region71: #{tpu_custom_call.1} parent=39 // pred_region
          %s1081 = ssub.s32 256, 256
          %1082 = vsyncadd %s1059, %s1081
          %s1083 = smul.addr %s35, 4
          %s1084 = sadd.s32 %s36, %s1083
          %s1085 = smul.addr %s1084, 64
          %s1086 = scalar_lea.hbm %s6, %s1085
          %s1087 = sshll.u32 %s1062, 4
          %s1088 = int_to_ptr.vmem [resolvable:$true] %s1087
          %1093 = dma.vmem_to_hbm [thread:$0]  %s1088, 256, %s1086, %s1059, 64, 64, 4
        $region72: #{tpu_custom_call.1} parent=39 // pred_fallthru
          _
      $region40: #{tpu_custom_call.1} parent=5 // pred_fallthru
        _
      %p1094 = scmp.le.s32.totalorder 2, %s26
      // Predicated region
      $region73: #{tpu_custom_call.1} parent=5 // pred_check
        %p1095 = pneg %p1094
      $region74: #{tpu_custom_call.1} parent=5 // pred_check_branch
        %1097 = sbr.rel (%p1095) target = $region76
      $region75: #{tpu_custom_call.1} parent=5 // pred_region
        %s1098 = ssub.s32 %s26, 2
        // Predicated region
        $region77: #{tpu_custom_call.1} parent=75 // pred_check
          %p1099 = pneg %p191
        $region78: #{tpu_custom_call.1} parent=75 // pred_check_branch
          %1101 = sbr.rel (%p1099) target = $region80
        $region79: #{tpu_custom_call.1} parent=75 // pred_region
          %s1102 = sand.u32 %s176, 1
          %s1103 = scalar_lea.sflag [#allocation6], %s1102
          %s1104 = sand.u32 %s176, 1
          %s1105 = smul.addr %s1104, 8
          %s1106 = scalar_lea.vmem [#allocation13], %s1105
          %1107 = dma.done %s1103, 128
        $region80: #{tpu_custom_call.1} parent=75 // pred_fallthru
          _
        // Predicated region
        $region81: #{tpu_custom_call.1} parent=75 // pred_check
          %p1108 = pneg %p219
        $region82: #{tpu_custom_call.1} parent=75 // pred_check_branch
          %1110 = sbr.rel (%p1108) target = $region84
        $region83: #{tpu_custom_call.1} parent=75 // pred_region
          %s1111 = sand.u32 %s204, 1
          %s1112 = scalar_lea.sflag [#allocation15], %s1111
          %s1113 = sand.u32 %s204, 1
          %s1114 = smul.addr %s1113, 16
          %s1115 = scalar_lea.vmem [#allocation14], %s1114
          %1116 = dma.done %s1112, 256
        $region84: #{tpu_custom_call.1} parent=75 // pred_fallthru
          _
      $region76: #{tpu_custom_call.1} parent=5 // pred_fallthru
        _
    $region6: #{tpu_custom_call.1} parent=1 // loop_footer
      %s30 = sadd.s32 1, %s26
    $region7: #{tpu_custom_call.1} parent=1 // loop_footer_branch
      %25 = sbr.rel target = $region3
    $region8: #{tpu_custom_call.1} parent=1 // loop_exit
      _
    %1117 = vsyncpa [#allocation5], 1
    %s1118 = scalar_lea.sflag [#allocation5], 1
    %1119 = vsyncpa %s1118, 1
    %1120 = vsyncpa [#allocation8], 1
    %s1121 = scalar_lea.sflag [#allocation8], 1
    %1122 = vsyncpa %s1121, 1
    %1123 = vsyncpa [#allocation11], 1
    %1124 = vsyncpa [#allocation6], 1
    %s1125 = scalar_lea.sflag [#allocation6], 1
    %1126 = vsyncpa %s1125, 1
    %1127 = vsyncpa [#allocation15], 1
    %s1128 = scalar_lea.sflag [#allocation15], 1
    %1129 = vsyncpa %s1128, 1

</llo_original>
